<compile_context>
chip_gen: v6e
topology: v6e:2x2x1
jax: 0.10.0
libtpu: 0.0.40
codegen_flags: <defaults>
</compile_context>

<pallas_src>
import functools

import jax
import jax.numpy as jnp
from jax import lax
from jax.experimental import pallas as pl
from jax.experimental.pallas import tpu as pltpu


def _round_up(a, b):
    return (a + b - 1) // b * b


def _datten_kernel(x_ref, w1_ref, w2_ref,
                   acc_out_ref, scores_ref, m_out_ref, l_out_ref,
                   m_sc, l_sc, acc_sc,
                   *, n_valid, tile_n, tiles_per_split, n_tiles):
    """One grid step processes a (TN, L) tile of x.

    Grid = (num_splits ["parallel"], tiles_per_split ["arbitrary"]).

    x_ref       : (TN, L)   input tile, native dtype (last tile may be partial)
    w1_ref      : (D, L)    first Linear weight, PyTorch layout (resident)
    w2_ref      : (1, D)    second Linear weight row, PyTorch layout (resident)
    acc_out_ref : (1, 1, L) per-split unnormalized pooled partial
    scores_ref  : (1, TN)   raw pre-softmax scores, lane-dense stream
    m_out_ref   : (1, 1, 1) per-split running max partial
    l_out_ref   : (1, 1, 1) per-split running sum partial
    m_sc/l_sc   : (1, 1)    online-softmax running max / sum (VMEM scratch)
    acc_sc      : (1, L)    unnormalized weighted-sum accumulator (VMEM scratch)
    """
    c = pl.program_id(0)             # split index (one per TensorCore on v7x)
    j = pl.program_id(1)             # tile index within the split
    t = c * tiles_per_split + j      # global tile index along N

    @pl.when(j == 0)
    def _init():
        # First-step invariant: m = -inf so alpha = exp(-inf - finite) == 0 (IEEE),
        # which multiplies the zero-initialized l/acc. m_new is always finite
        # because every tile overlaps [0, N) by construction.
        m_sc[...] = jnp.full_like(m_sc, -jnp.inf)
        l_sc[...] = jnp.zeros_like(l_sc)
        acc_sc[...] = jnp.zeros_like(acc_sc)

    x_nat = x_ref[...]                                            # (TN, L)

    # ---- hT = relu(W1 @ x^T): (D, TN) with TN on lanes (full-width MXU output),
    #      native-dtype operands, f32 accumulation.
    hT = lax.dot_general(
        w1_ref[...], x_nat,
        dimension_numbers=(((1,), (1,)), ((), ())),               # contract over L
        preferred_element_type=jnp.float32)                       # (D, TN) f32
    hT = jnp.maximum(hT, 0.0)

    # ---- s = w2 . hT : (1, TN) lane-major. Rides the otherwise-idle MXU tail
    #      (1/L of the main matmul's MACs); keeps the softmax path lane-dense.
    w2f = w2_ref[...].astype(jnp.float32)                         # (1, D)
    s = lax.dot_general(
        w2f, hT,
        dimension_numbers=(((1,), (0,)), ((), ())),
        preferred_element_type=jnp.float32)                       # (1, TN) f32

    partial_tail = (n_valid % tile_n) != 0                        # static
    last_t = n_tiles - 1
    if partial_tail:
        lane = lax.broadcasted_iota(jnp.int32, (1, tile_n), 1)
        lane_valid = (t * tile_n + lane) < n_valid                # (1, TN)
        s_masked = jnp.where(lane_valid, s, -jnp.inf)
    else:
        # N divides tile_n: no masking work at all on any step.
        s_masked = s

    # ---- online softmax update (all f32 on VPU/EUP).
    m_prev = m_sc[...]                                            # (1, 1)
    m_new = jnp.maximum(m_prev, jnp.max(s_masked, axis=1, keepdims=True))
    alpha = jnp.exp(m_prev - m_new)                               # (1, 1)
    e = jnp.exp(s_masked - m_new)                                 # (1, TN); 0 on masked lanes
    l_sc[...] = alpha * l_sc[...] + jnp.sum(e, axis=1, keepdims=True)
    m_sc[...] = m_new

    # ---- pooled accumulation on the MXU: acc(1, L) += e(1, TN) @ x(TN, L).
    def _accumulate(x_tile):
        pooled = lax.dot_general(
            e.astype(x_tile.dtype), x_tile,
            dimension_numbers=(((1,), (0,)), ((), ())),
            preferred_element_type=jnp.float32)                   # (1, L) f32
        acc_sc[...] = alpha * acc_sc[...] + pooled

    if not partial_tail:
        _accumulate(x_nat)
    else:
        # Only the globally-last (ragged) tile pays the x-row zeroing: garbage rows
        # of the partial input block must not reach the pooled matmul.
        @pl.when(t != last_t)
        def _full_tile():
            _accumulate(x_nat)

        @pl.when(t == last_t)
        def _ragged_tile():
            row = t * tile_n + lax.broadcasted_iota(jnp.int32, (tile_n, 1), 0)
            x_safe = jnp.where(row < n_valid, x_nat, jnp.zeros_like(x_nat))
            _accumulate(x_safe)

    # ---- stream raw (pre-softmax) scores, lane-dense.
    scores_ref[...] = s_masked

    # ---- per-split partials (merged by the tiny wrapper epilogue).
    @pl.when(j == tiles_per_split - 1)
    def _finish():
        acc_out_ref[0] = acc_sc[...]
        m_out_ref[0] = m_sc[...]
        l_out_ref[0] = l_sc[...]


def datten_forward(x, w1, w2, return_attn=False, no_norm=False,
                   tile_n=1024, num_splits=None):
    """DAttention.forward (gated=False, relu, no bias, no dropout).

    x  : (N, L)  instance features (feed bf16 on v5e/v6e/v7x for peak; f32 also works)
    w1 : (D, L)  first Linear weight (PyTorch out x in layout), D == 128
    w2 : (1, D)  second Linear weight row

    tile_n     : rows of x per grid step; multiple of 128. Guidance: ~2048 on
                 v5e/v6e, 1024-2048 on v7x (clamped to the problem size below).
    num_splits : leading "parallel" grid axis (per-TensorCore partial reductions
                 on v7x). Default: 2 when it divides the tile count, else 1.
    """
    N, L = x.shape
    D, L_w = w1.shape
    assert L_w == L and w2.shape == (1, D), "expected w1 (D, L) and w2 (1, D)"

    # Run the MXU at the native streaming dtype of x (no hidden upcast copies).
    w1 = w1.astype(x.dtype)

    tile_n = int(min(tile_n, _round_up(N, 128)))
    if tile_n <= 0 or tile_n % 128 != 0:
        raise ValueError("tile_n must be a positive multiple of 128")

    n_tiles = pl.cdiv(N, tile_n)

    # v7x dual-TensorCore split of the N reduction; on 1-TC chips it's just a loop.
    if num_splits is None:
        num_splits = 2 if n_tiles % 2 == 0 else 1
    if num_splits < 1 or n_tiles % num_splits != 0:
        num_splits = 1
    tiles_per_split = n_tiles // num_splits

    kernel = functools.partial(_datten_kernel, n_valid=N, tile_n=tile_n,
                               tiles_per_split=tiles_per_split, n_tiles=n_tiles)

    itemsize = jnp.dtype(x.dtype).itemsize
    # Actual VMEM footprint (double-buffered streams + resident weights + scratch)
    # plus headroom — do not claim all of a v7x core's 64 MiB.
    vmem_need = (2 * tile_n * L * itemsize      # x tile, double-buffered
                 + 2 * D * L * itemsize         # W1 (constant index map)
                 + 2 * D * itemsize             # w2
                 + 2 * tile_n * 4               # streamed scores tile
                 + 4 * (3 * L + 16))            # acc scratch + partial outputs + m/l
    vmem_limit = int(vmem_need + (8 << 20))

    cost = pl.CostEstimate(
        flops=2 * N * L * D + 2 * N * D + 2 * N * L + 8 * N,
        transcendentals=N + n_tiles,
        bytes_accessed=itemsize * (N * L + D * L + D) + 4 * (N + 3 * (L + 2)),
    )

    acc_p, scores, m_p, l_p = pl.pallas_call(
        kernel,
        grid=(num_splits, tiles_per_split),
        in_specs=[
            pl.BlockSpec((tile_n, L), lambda c, j: (c * tiles_per_split + j, 0)),  # x stream
            pl.BlockSpec((D, L), lambda c, j: (0, 0)),                             # W1 resident
            pl.BlockSpec((1, D), lambda c, j: (0, 0)),                             # w2 resident
        ],
        out_specs=(
            pl.BlockSpec((1, 1, L), lambda c, j: (c, 0, 0)),                       # acc partial
            pl.BlockSpec((1, tile_n), lambda c, j: (0, c * tiles_per_split + j)),  # raw scores
            pl.BlockSpec((1, 1, 1), lambda c, j: (c, 0, 0)),                       # m partial
            pl.BlockSpec((1, 1, 1), lambda c, j: (c, 0, 0)),                       # l partial
        ),
        out_shape=(
            jax.ShapeDtypeStruct((num_splits, 1, L), jnp.float32),
            jax.ShapeDtypeStruct((1, N), jnp.float32),
            jax.ShapeDtypeStruct((num_splits, 1, 1), jnp.float32),
            jax.ShapeDtypeStruct((num_splits, 1, 1), jnp.float32),
        ),
        scratch_shapes=[
            pltpu.VMEM((1, 1), jnp.float32),   # running max m
            pltpu.VMEM((1, 1), jnp.float32),   # running sum l
            pltpu.VMEM((1, L), jnp.float32),   # unnormalized pooled accumulator
        ],
        compiler_params=pltpu.CompilerParams(
            dimension_semantics=("parallel", "arbitrary"),
            vmem_limit_bytes=vmem_limit,
        ),
        cost_estimate=cost,
    )(x, w1, w2)

    # Tiny O(num_splits * L) epilogue: merge per-split online-softmax partials.
    m_s = m_p.reshape(num_splits)
    l_s = l_p.reshape(num_splits)
    acc_s = acc_p.reshape(num_splits, L)
    m_g = jnp.max(m_s)
    scale = jnp.exp(m_s - m_g)                               # (S,)
    l_g = jnp.sum(scale * l_s)
    out = (jnp.sum(scale[:, None] * acc_s, axis=0) / l_g).reshape(1, L)

    raw = scores                                             # (1, N) pre-softmax A^T
    attn = raw if no_norm else jnp.exp(raw - m_g) / l_g

    # Module does x.squeeze(1): for (1, L) with L != 1 this is a no-op -> (1, L).
    if return_attn:
        return out, attn
    return out


def datten_reference(x, w1, w2):
    """Pure-JAX reference of Attention.forward (relu, no bias, no dropout)."""
    h = jnp.maximum(x @ w1.T, 0.0)           # (N, D)
    a = (h @ w2.T).T                         # (1, N)
    p = jax.nn.softmax(a, axis=-1)
    return p @ x, p                          # (1, L), (1, N)


if __name__ == "__main__":
    # Small shapes consistent with the module (input_dim=L, D fixed at 128, K=1).
    # N=500 is NOT a multiple of the 128-row tile: exercises the multi-tile online
    # softmax, the dual-split partial merge, and the ragged-last-tile masking path
    # (no wrapper-side padding copy anymore).
    N, L, D, K = 500, 256, 128, 1

    key = jax.random.PRNGKey(0)
    kx, k1, k2 = jax.random.split(key, 3)

    x = jax.random.normal(kx, (N, L), dtype=jnp.float32)
    w1 = jax.random.normal(k1, (D, L), dtype=jnp.float32) * (1.0 / jnp.sqrt(L))
    w2 = jax.random.normal(k2, (K, D), dtype=jnp.float32) * (1.0 / jnp.sqrt(D))

    ref_out, ref_attn = datten_reference(x, w1, w2)

    # f32 path (exact module semantics).
    out, attn = datten_forward(x, w1, w2, return_attn=True, tile_n=128, num_splits=2)
    out = jax.block_until_ready(out)
    attn = jax.block_until_ready(attn)
    assert out.shape == (1, L) and attn.shape == (1, N)
    assert jnp.allclose(attn, ref_attn, atol=1e-5, rtol=1e-4)
    assert jnp.allclose(out, ref_out, atol=2e-4, rtol=1e-4)

    # no_norm path returns the raw pre-softmax scores (A_ori).
    _, attn_raw = datten_forward(x, w1, w2, return_attn=True, no_norm=True, tile_n=128)
    attn_raw = jax.block_until_ready(attn_raw)
    raw_ref = (jnp.maximum(x @ w1.T, 0.0) @ w2.T).T
    assert jnp.allclose(attn_raw, raw_ref, atol=1e-3, rtol=1e-3)

    # bf16 streaming path (halved HBM traffic, native MXU rate on v6e/v7x) —
    # compared loosely against the f32 reference.
    out_bf, attn_bf = datten_forward(x.astype(jnp.bfloat16), w1.astype(jnp.bfloat16),
                                     w2.astype(jnp.bfloat16), return_attn=True,
                                     tile_n=128, num_splits=2)
    out_bf = jax.block_until_ready(out_bf)
    assert jnp.allclose(attn_bf.astype(jnp.float32), ref_attn, atol=1e-3, rtol=1e-1)
    assert jnp.allclose(out_bf.astype(jnp.float32), ref_out, atol=5e-2, rtol=1e-1)

    print("KERNEL_OK")
</pallas_src>

<mosaic_0001>
module attributes {stable_mosaic.version = 11 : i64} {
  func.func @_datten_kernel(%arg0: i32, %arg1: i32, %arg2: memref<128x256xf32, #tpu.memory_space<vmem>>, %arg3: memref<128x256xf32, #tpu.memory_space<vmem>>, %arg4: memref<1x128xf32, #tpu.memory_space<vmem>>, %arg5: memref<1x1x256xf32, #tpu.memory_space<vmem>>, %arg6: memref<1x128xf32, #tpu.memory_space<vmem>>, %arg7: memref<1x1x1xf32, #tpu.memory_space<vmem>>, %arg8: memref<1x1x1xf32, #tpu.memory_space<vmem>>, %arg9: memref<1x1xf32, #tpu.memory_space<vmem>>, %arg10: memref<1x1xf32, #tpu.memory_space<vmem>>, %arg11: memref<1x256xf32, #tpu.memory_space<vmem>>) attributes {dimension_semantics = [#tpu.dimension_semantics<parallel>, #tpu.dimension_semantics<arbitrary>], iteration_bounds = array<i64: 2, 2>, scalar_prefetch = 0 : i64, scratch_operands = 3 : i64, tpu.core_type = #tpu.core_type<tc>, window_params = [{transform_indices = @transform_0, window_bounds = array<i64: 128, 256>}, {pipeline_mode = #tpu.pipeline_mode<synchronous>, transform_indices = @transform_1, window_bounds = array<i64: 128, 256>}, {pipeline_mode = #tpu.pipeline_mode<synchronous>, transform_indices = @transform_2, window_bounds = array<i64: 1, 128>}, {transform_indices = @transform_3, window_bounds = array<i64: 1, 1, 256>}, {transform_indices = @transform_4, window_bounds = array<i64: 1, 128>}, {transform_indices = @transform_5, window_bounds = array<i64: 1, 1, 1>}, {transform_indices = @transform_6, window_bounds = array<i64: 1, 1, 1>}]} {
    %c2_i32 = arith.constant 2 : i32
    %0 = arith.muli %arg0, %c2_i32 : i32
    %1 = arith.addi %0, %arg1 : i32
    %c0_i32 = arith.constant 0 : i32
    %2 = arith.cmpi eq, %arg1, %c0_i32 : i32
    %3 = arith.extui %2 : i1 to i32
    %c0_i32_0 = arith.constant 0 : i32
    %4 = arith.cmpi ne, %3, %c0_i32_0 : i32
    scf.if %4 {
      %cst_25 = arith.constant 0xFF800000 : f32
      %46 = vector.broadcast %cst_25 : f32 to vector<1x1xf32>
      %c0_26 = arith.constant 0 : index
      %c0_27 = arith.constant 0 : index
      %47 = vector.load %arg9[%c0_26, %c0_27] : memref<1x1xf32, #tpu.memory_space<vmem>>, vector<1x1xf32>
      tpu.vector_store %arg9[%c0_26, %c0_27], %46 {strides = array<i32>} : memref<1x1xf32, #tpu.memory_space<vmem>>, vector<1x1xf32>,
      %cst_28 = arith.constant 0.000000e+00 : f32
      %48 = vector.broadcast %cst_28 : f32 to vector<1x1xf32>
      %c0_29 = arith.constant 0 : index
      %c0_30 = arith.constant 0 : index
      %49 = vector.load %arg10[%c0_29, %c0_30] : memref<1x1xf32, #tpu.memory_space<vmem>>, vector<1x1xf32>
      tpu.vector_store %arg10[%c0_29, %c0_30], %48 {strides = array<i32>} : memref<1x1xf32, #tpu.memory_space<vmem>>, vector<1x1xf32>,
      %cst_31 = arith.constant 0.000000e+00 : f32
      %50 = vector.broadcast %cst_31 : f32 to vector<1x256xf32>
      %c0_32 = arith.constant 0 : index
      %c0_33 = arith.constant 0 : index
      %51 = vector.load %arg11[%c0_32, %c0_33] : memref<1x256xf32, #tpu.memory_space<vmem>>, vector<1x256xf32>
      tpu.vector_store %arg11[%c0_32, %c0_33], %50 {strides = array<i32>} : memref<1x256xf32, #tpu.memory_space<vmem>>, vector<1x256xf32>,
    } else {
    }
    %c0 = arith.constant 0 : index
    %c0_1 = arith.constant 0 : index
    %5 = vector.load %arg2[%c0, %c0_1] : memref<128x256xf32, #tpu.memory_space<vmem>>, vector<128x256xf32>
    %c0_2 = arith.constant 0 : index
    %c0_3 = arith.constant 0 : index
    %6 = vector.load %arg3[%c0_2, %c0_3] : memref<128x256xf32, #tpu.memory_space<vmem>>, vector<128x256xf32>
    %cst = arith.constant dense<0.000000e+00> : vector<128x128xf32>
    %7 = tpu.matmul %6, %5, %cst {dimension_numbers = #tpu.dot_dimension_numbers<[1], [1], [0], [0], [0, 0, 1, 0], [], []>} : vector<128x256xf32>, vector<128x256xf32>, vector<128x128xf32> -> vector<128x128xf32>
    %cst_4 = arith.constant 0.000000e+00 : f32
    %8 = vector.broadcast %cst_4 : f32 to vector<128x128xf32>
    %9 = arith.maximumf %7, %8 : vector<128x128xf32>
    %c0_5 = arith.constant 0 : index
    %c0_6 = arith.constant 0 : index
    %10 = vector.load %arg4[%c0_5, %c0_6] : memref<1x128xf32, #tpu.memory_space<vmem>>, vector<1x128xf32>
    %cst_7 = arith.constant dense<0.000000e+00> : vector<1x128xf32>
    %11 = tpu.matmul %10, %9, %cst_7 {dimension_numbers = #tpu.dot_dimension_numbers<[1], [0], [0], [1], [0, 0, 1, 1], [], []>} : vector<1x128xf32>, vector<128x128xf32>, vector<1x128xf32> -> vector<1x128xf32>
    %12 = tpu.iota {dimensions = array<i32: 1>} : vector<1x128xi32>
    %c128_i32 = arith.constant 128 : i32
    %13 = arith.muli %1, %c128_i32 : i32
    %14 = vector.broadcast %13 : i32 to vector<1x128xi32>
    %15 = arith.addi %14, %12 : vector<1x128xi32>
    %c500_i32 = arith.constant 500 : i32
    %16 = vector.broadcast %c500_i32 : i32 to vector<1x128xi32>
    %17 = arith.cmpi slt, %15, %16 : vector<1x128xi32>
    %cst_8 = arith.constant 0xFF800000 : f32
    %18 = vector.broadcast %cst_8 : f32 to vector<1x128xf32>
    %19 = arith.select %17, %11, %18 : vector<1x128xi1>, vector<1x128xf32>
    %c0_9 = arith.constant 0 : index
    %c0_10 = arith.constant 0 : index
    %20 = vector.load %arg9[%c0_9, %c0_10] : memref<1x1xf32, #tpu.memory_space<vmem>>, vector<1x1xf32>
    %cst_11 = arith.constant dense<0xFF800000> : vector<1xf32>
    %21 = vector.multi_reduction <maximumf>, %19, %cst_11 [1] : vector<1x128xf32> to vector<1xf32>
    %22 = vector.shape_cast %21 : vector<1xf32> to vector<1x1xf32>
    %23 = arith.maximumf %20, %22 : vector<1x1xf32>
    %24 = arith.subf %20, %23 : vector<1x1xf32>
    %25 = math.exp %24 : vector<1x1xf32>
    %26 = vector.broadcast %23 : vector<1x1xf32> to vector<1x128xf32>
    %27 = arith.subf %19, %26 : vector<1x128xf32>
    %28 = math.exp %27 : vector<1x128xf32>
    %c0_12 = arith.constant 0 : index
    %c0_13 = arith.constant 0 : index
    %29 = vector.load %arg10[%c0_12, %c0_13] : memref<1x1xf32, #tpu.memory_space<vmem>>, vector<1x1xf32>
    %30 = arith.mulf %25, %29 : vector<1x1xf32>
    %cst_14 = arith.constant dense<0.000000e+00> : vector<1xf32>
    %31 = vector.multi_reduction <add>, %28, %cst_14 [1] : vector<1x128xf32> to vector<1xf32>
    %32 = vector.shape_cast %31 : vector<1xf32> to vector<1x1xf32>
    %33 = arith.addf %30, %32 : vector<1x1xf32>
    %c0_15 = arith.constant 0 : index
    %c0_16 = arith.constant 0 : index
    %34 = vector.load %arg10[%c0_15, %c0_16] : memref<1x1xf32, #tpu.memory_space<vmem>>, vector<1x1xf32>
    tpu.vector_store %arg10[%c0_15, %c0_16], %33 {strides = array<i32>} : memref<1x1xf32, #tpu.memory_space<vmem>>, vector<1x1xf32>,
    %c0_17 = arith.constant 0 : index
    %c0_18 = arith.constant 0 : index
    %35 = vector.load %arg9[%c0_17, %c0_18] : memref<1x1xf32, #tpu.memory_space<vmem>>, vector<1x1xf32>
    tpu.vector_store %arg9[%c0_17, %c0_18], %23 {strides = array<i32>} : memref<1x1xf32, #tpu.memory_space<vmem>>, vector<1x1xf32>,
    %c3_i32 = arith.constant 3 : i32
    %36 = arith.cmpi ne, %1, %c3_i32 : i32
    %37 = arith.extui %36 : i1 to i32
    %c0_i32_19 = arith.constant 0 : i32
    %38 = arith.cmpi ne, %37, %c0_i32_19 : i32
    scf.if %38 {
      %cst_25 = arith.constant dense<0.000000e+00> : vector<1x256xf32>
      %46 = tpu.matmul %28, %5, %cst_25 {dimension_numbers = #tpu.dot_dimension_numbers<[1], [0], [0], [1], [0, 0, 1, 1], [], []>} : vector<1x128xf32>, vector<128x256xf32>, vector<1x256xf32> -> vector<1x256xf32>
      %c0_26 = arith.constant 0 : index
      %c0_27 = arith.constant 0 : index
      %47 = vector.load %arg11[%c0_26, %c0_27] : memref<1x256xf32, #tpu.memory_space<vmem>>, vector<1x256xf32>
      %48 = vector.broadcast %25 : vector<1x1xf32> to vector<1x256xf32>
      %49 = arith.mulf %48, %47 : vector<1x256xf32>
      %50 = arith.addf %49, %46 : vector<1x256xf32>
      %c0_28 = arith.constant 0 : index
      %c0_29 = arith.constant 0 : index
      %51 = vector.load %arg11[%c0_28, %c0_29] : memref<1x256xf32, #tpu.memory_space<vmem>>, vector<1x256xf32>
      tpu.vector_store %arg11[%c0_28, %c0_29], %50 {strides = array<i32>} : memref<1x256xf32, #tpu.memory_space<vmem>>, vector<1x256xf32>,
    } else {
    }
    %c3_i32_20 = arith.constant 3 : i32
    %39 = arith.cmpi eq, %1, %c3_i32_20 : i32
    %40 = arith.extui %39 : i1 to i32
    %c0_i32_21 = arith.constant 0 : i32
    %41 = arith.cmpi ne, %40, %c0_i32_21 : i32
    scf.if %41 {
      %c128_i32_25 = arith.constant 128 : i32
      %46 = arith.muli %1, %c128_i32_25 : i32
      %47 = tpu.iota {dimensions = array<i32: 0>} : vector<128x1xi32>
      %48 = vector.broadcast %46 : i32 to vector<128x1xi32>
      %49 = arith.addi %48, %47 : vector<128x1xi32>
      %c500_i32_26 = arith.constant 500 : i32
      %50 = vector.broadcast %c500_i32_26 : i32 to vector<128x1xi32>
      %51 = arith.cmpi slt, %49, %50 : vector<128x1xi32>
      %cst_27 = arith.constant 0.000000e+00 : f32
      %52 = vector.broadcast %cst_27 : f32 to vector<128x256xf32>
      %53 = vector.shape_cast %51 : vector<128x1xi1> to vector<128x1xi1>
      %54 = vector.broadcast %53 : vector<128x1xi1> to vector<128x256xi1>
      %55 = arith.select %54, %5, %52 : vector<128x256xi1>, vector<128x256xf32>
      %cst_28 = arith.constant dense<0.000000e+00> : vector<1x256xf32>
      %56 = tpu.matmul %28, %55, %cst_28 {dimension_numbers = #tpu.dot_dimension_numbers<[1], [0], [0], [1], [0, 0, 1, 1], [], []>} : vector<1x128xf32>, vector<128x256xf32>, vector<1x256xf32> -> vector<1x256xf32>
      %c0_29 = arith.constant 0 : index
      %c0_30 = arith.constant 0 : index
      %57 = vector.load %arg11[%c0_29, %c0_30] : memref<1x256xf32, #tpu.memory_space<vmem>>, vector<1x256xf32>
      %58 = vector.broadcast %25 : vector<1x1xf32> to vector<1x256xf32>
      %59 = arith.mulf %58, %57 : vector<1x256xf32>
      %60 = arith.addf %59, %56 : vector<1x256xf32>
      %c0_31 = arith.constant 0 : index
      %c0_32 = arith.constant 0 : index
      %61 = vector.load %arg11[%c0_31, %c0_32] : memref<1x256xf32, #tpu.memory_space<vmem>>, vector<1x256xf32>
      tpu.vector_store %arg11[%c0_31, %c0_32], %60 {strides = array<i32>} : memref<1x256xf32, #tpu.memory_space<vmem>>, vector<1x256xf32>,
    } else {
    }
    %c0_22 = arith.constant 0 : index
    %c0_23 = arith.constant 0 : index
    %42 = vector.load %arg6[%c0_22, %c0_23] : memref<1x128xf32, #tpu.memory_space<vmem>>, vector<1x128xf32>
    tpu.vector_store %arg6[%c0_22, %c0_23], %19 {strides = array<i32>} : memref<1x128xf32, #tpu.memory_space<vmem>>, vector<1x128xf32>,
    %c1_i32 = arith.constant 1 : i32
    %43 = arith.cmpi eq, %arg1, %c1_i32 : i32
    %44 = arith.extui %43 : i1 to i32
    %c0_i32_24 = arith.constant 0 : i32
    %45 = arith.cmpi ne, %44, %c0_i32_24 : i32
    scf.if %45 {
      %c0_25 = arith.constant 0 : index
      %c0_26 = arith.constant 0 : index
      %46 = vector.load %arg11[%c0_25, %c0_26] : memref<1x256xf32, #tpu.memory_space<vmem>>, vector<1x256xf32>
      %c0_27 = arith.constant 0 : index
      %c0_28 = arith.constant 0 : index
      %c0_29 = arith.constant 0 : index
      %47 = vector.load %arg5[%c0_27, %c0_28, %c0_29] : memref<1x1x256xf32, #tpu.memory_space<vmem>>, vector<1x1x256xf32>
      %48 = vector.shape_cast %47 : vector<1x1x256xf32> to vector<1x256xf32>
      %49 = vector.shape_cast %46 : vector<1x256xf32> to vector<1x1x256xf32>
      tpu.vector_store %arg5[%c0_27, %c0_28, %c0_29], %49 {strides = array<i32>} : memref<1x1x256xf32, #tpu.memory_space<vmem>>, vector<1x1x256xf32>,
      %c0_30 = arith.constant 0 : index
      %c0_31 = arith.constant 0 : index
      %50 = vector.load %arg9[%c0_30, %c0_31] : memref<1x1xf32, #tpu.memory_space<vmem>>, vector<1x1xf32>
      %c0_32 = arith.constant 0 : index
      %c0_33 = arith.constant 0 : index
      %c0_34 = arith.constant 0 : index
      %51 = vector.load %arg7[%c0_32, %c0_33, %c0_34] : memref<1x1x1xf32, #tpu.memory_space<vmem>>, vector<1x1x1xf32>
      %52 = vector.shape_cast %51 : vector<1x1x1xf32> to vector<1x1xf32>
      %53 = vector.shape_cast %50 : vector<1x1xf32> to vector<1x1x1xf32>
      tpu.vector_store %arg7[%c0_32, %c0_33, %c0_34], %53 {strides = array<i32>} : memref<1x1x1xf32, #tpu.memory_space<vmem>>, vector<1x1x1xf32>,
      %c0_35 = arith.constant 0 : index
      %c0_36 = arith.constant 0 : index
      %54 = vector.load %arg10[%c0_35, %c0_36] : memref<1x1xf32, #tpu.memory_space<vmem>>, vector<1x1xf32>
      %c0_37 = arith.constant 0 : index
      %c0_38 = arith.constant 0 : index
      %c0_39 = arith.constant 0 : index
      %55 = vector.load %arg8[%c0_37, %c0_38, %c0_39] : memref<1x1x1xf32, #tpu.memory_space<vmem>>, vector<1x1x1xf32>
      %56 = vector.shape_cast %55 : vector<1x1x1xf32> to vector<1x1xf32>
      %57 = vector.shape_cast %54 : vector<1x1xf32> to vector<1x1x1xf32>
      tpu.vector_store %arg8[%c0_37, %c0_38, %c0_39], %57 {strides = array<i32>} : memref<1x1x1xf32, #tpu.memory_space<vmem>>, vector<1x1x1xf32>,
    } else {
    }
    return
  }
  func.func @transform_0(%arg0: i32, %arg1: i32) -> (i32, i32) {
    %c2_i32 = arith.constant 2 : i32
    %0 = arith.muli %arg0, %c2_i32 : i32
    %1 = arith.addi %0, %arg1 : i32
    %c0_i32 = arith.constant 0 : i32
    %c0_i32_0 = arith.constant 0 : i32
    return %1, %c0_i32 : i32, i32
  }
  func.func @transform_1(%arg0: i32, %arg1: i32) -> (i32, i32) {
    %c0_i32 = arith.constant 0 : i32
    %c0_i32_0 = arith.constant 0 : i32
    %c0_i32_1 = arith.constant 0 : i32
    return %c0_i32, %c0_i32_0 : i32, i32
  }
  func.func @transform_2(%arg0: i32, %arg1: i32) -> (i32, i32) {
    %c0_i32 = arith.constant 0 : i32
    %c0_i32_0 = arith.constant 0 : i32
    %c0_i32_1 = arith.constant 0 : i32
    return %c0_i32, %c0_i32_0 : i32, i32
  }
  func.func @transform_3(%arg0: i32, %arg1: i32) -> (i32, i32, i32) {
    %c0_i32 = arith.constant 0 : i32
    %c0_i32_0 = arith.constant 0 : i32
    %c0_i32_1 = arith.constant 0 : i32
    return %arg0, %c0_i32, %c0_i32_0 : i32, i32, i32
  }
  func.func @transform_4(%arg0: i32, %arg1: i32) -> (i32, i32) {
    %c2_i32 = arith.constant 2 : i32
    %0 = arith.muli %arg0, %c2_i32 : i32
    %1 = arith.addi %0, %arg1 : i32
    %c0_i32 = arith.constant 0 : i32
    %c0_i32_0 = arith.constant 0 : i32
    return %c0_i32, %1 : i32, i32
  }
  func.func @transform_5(%arg0: i32, %arg1: i32) -> (i32, i32, i32) {
    %c0_i32 = arith.constant 0 : i32
    %c0_i32_0 = arith.constant 0 : i32
    %c0_i32_1 = arith.constant 0 : i32
    return %arg0, %c0_i32, %c0_i32_0 : i32, i32, i32
  }
  func.func @transform_6(%arg0: i32, %arg1: i32) -> (i32, i32, i32) {
    %c0_i32 = arith.constant 0 : i32
    %c0_i32_0 = arith.constant 0 : i32
    %c0_i32_1 = arith.constant 0 : i32
    return %arg0, %c0_i32, %c0_i32_0 : i32, i32, i32
  }
}

</mosaic_0001>

<llo_original>
// kernel: tpu_custom_call.1
$region0: #{tpu_custom_call.1}
  #allocation0 [shape = 'u32[]', space=smem, size = 0x4, offset = 0x4, fixed_abs, tag = 'smem constant byte address 0x4 - core index']
  #allocation1 [shape = 'u32[144,128]{1,0:T(1,128)}', space=vmem, size = 0x12000, scoped, tag = 'internal scratch']
  #allocation2 [shape = 'f32[1,1]{1,0:T(1,128)}', space=vmem, size = 0x200, scoped, tag = 'scratch operand']
  #allocation3 [shape = 'f32[1,1]{1,0:T(1,128)}', space=vmem, size = 0x200, scoped, tag = 'scratch operand']
  #allocation4 [shape = 'f32[1,256]{1,0:T(1,128)}', space=vmem, size = 0x400, scoped, tag = 'scratch operand']
  %s0 = inlined_call_operand.hbm [shape: f32[500,256], index: 0, kind: input, shape index: {}]
  %s1 = inlined_call_operand.hbm [shape: f32[128,256], index: 1, kind: input, shape index: {}]
  %s2 = inlined_call_operand.vmem [shape: f32[1,128], index: 2, kind: input, shape index: {}]
  %s3 = inlined_call_operand.hbm [shape: f32[2,1,256], index: 3, kind: output, shape index: {0}]
  %s4 = inlined_call_operand.hbm [shape: f32[1,500], index: 4, kind: output, shape index: {1}]
  %s5 = inlined_call_operand.vmem [shape: f32[2,1,1], index: 5, kind: output, shape index: {2}]
  %s6 = inlined_call_operand.vmem [shape: f32[2,1,1], index: 6, kind: output, shape index: {3}]
  %7 = xla_tuple %s3, %s4, %s5, %s6
  %s8 = sld [smem:[#allocation0]]
  $region93: #{tpu_custom_call.1} parent=0
    _
  %s10 = ssub.s32 1, %s8
  %s11 = scalar_select 0, %s10, %s8
  $region1: #{tpu_custom_call.1} parent=0
    #allocation5 [shape = 'u8[262144]{0}', space=vmem, size = 0x40000, scoped, tag = 'input window, operand 0']
    #allocation6 [shape = 's32[2]{0}', space=sflag, size = 0x8, scoped, tag = 'scoped memory for tpu_custom_call.1']
    #allocation7 [shape = 's32[2]{0}', space=sflag, size = 0x8, scoped, tag = 'scoped memory for tpu_custom_call.1']
    #allocation8 [shape = 'u8[131072]{0}', space=vmem, size = 0x20000, scoped, tag = 'input window, operand 1, single buffered']
    #allocation9 [shape = 's32[1]{0}', space=sflag, size = 0x4, scoped, tag = 'scoped memory for tpu_custom_call.1']
    #allocation10 [shape = 'u8[2048]{0}', space=vmem, size = 0x800, scoped, tag = 'output window, operand 0']
    #allocation11 [shape = 'u8[1024]{0}', space=vmem, size = 0x400, scoped, tag = 'output window, operand 1']
    #allocation12 [shape = 's32[2]{0}', space=sflag, size = 0x8, scoped, tag = 'scoped memory for tpu_custom_call.1']
    %12 = vsyncpa [#allocation6], 0
    %s13 = scalar_lea.sflag [#allocation6], 1
    %14 = vsyncpa %s13, 0
    %15 = vsyncpa [#allocation9], 0
    %16 = vsyncpa [#allocation7], 0
    %s17 = scalar_lea.sflag [#allocation7], 1
    %18 = vsyncpa %s17, 0
    %19 = vsyncpa [#allocation12], 0
    %s20 = scalar_lea.sflag [#allocation12], 1
    %21 = vsyncpa %s20, 0
    loop: start=0, step=1, limit=6
    $region2: #{tpu_custom_call.1} parent=1 // loop_pre_header
      _
    $region3: #{tpu_custom_call.1} parent=1 // loop_header
      %s23 = sphi 0, %s27
      %p24 = scmp.ge.s32.totalorder %s23, 6
      %s30 = sphi 0, %s42
      %s31 = sphi 0, %s38
      %s32 = sphi 0, %s30
      %s33 = sphi 0, %s31
      %s34 = sphi 0, %s32
      %s35 = sphi 0, %s33
      %s49 = sphi 0, %s51
      %s52 = sphi 0, %s49
      %s53 = sphi 0, %s52
      %s69 = sphi 0, %s53
      %s73 = sphi 0, %s73
      %s75 = sphi 0, %s73
      %s76 = sphi 0, %s75
      %s90 = sphi 0, %s76
      %s94 = sphi 0, %s94
      %s96 = sphi 0, %s94
      %s97 = sphi 0, %s96
      %s111 = sphi 0, %s97
      %s117 = sphi 0, %s119
      %s120 = sphi 0, %s117
      %s121 = sphi 0, %s120
      %s137 = sphi 0, %s121
      %s147 = sphi 0, %s149
      %s150 = sphi 0, %s147
      %s151 = sphi 0, %s150
      %s167 = sphi 0, %s151
      %s173 = sphi 0, %s175
      %s176 = sphi 0, %s173
      %s177 = sphi 0, %s176
      %s193 = sphi 0, %s177
      %s199 = sphi 0, %s201
      %s202 = sphi 0, %s199
      %s203 = sphi 0, %s202
      %s219 = sphi 0, %s203
    $region4: #{tpu_custom_call.1} parent=1 // loop_header_branch
      %26 = sbr.rel (%p24) target = $region8
    $region5: #{tpu_custom_call.1} parent=1 // loop_body
      %s28 = ssub.s32 %s23, 1
      %s29 = ssub.s32 %s23, 2
      %s36 = sadd.s32 1, %s31
      %p37 = scmp.ge.s32.totalorder %s36, 2
      %s38 = scalar_select %p37, 0, %s36
      %s39 = sadd.s32 1, %s30
      %s40 = scalar_select %p37, %s39, %s30
      %p41 = scmp.ge.s32.totalorder %s40, 2
      %s42 = scalar_select %p41, 0, %s40
      %s43 = smul.u32 %s30, 2
      %s44 = sadd.s32 %s43, %s31
      %s45 = smul.u32 %s42, 2
      %s46 = sadd.s32 %s45, %s38
      %s47 = ssub.s32 %s44, %s46
      %p48 = scmp.eq.s32.totalorder %s47, 0
      %s50 = sadd.s32 %s49, 1
      %s51 = scalar_select %p48, %s49, %s50
      %p54 = pneg %p48
      %p55 = scmp.eq.s32.totalorder %s23, 3
      %p56 = por %p54, %p55
      %p57 = scmp.ne.s32.totalorder %s49, %s52
      %p58 = scmp.eq.s32.totalorder %s23, 0
      %p59 = por %p57, %p58
      %p60 = scmp.ne.s32.totalorder %s49, %s52
      %p61 = scmp.eq.s32.totalorder %s28, 3
      %p62 = por %p60, %p61
      %p63 = scmp.ne.s32.totalorder %s52, %s53
      %p64 = scmp.eq.s32.totalorder %s28, 0
      %p65 = por %p63, %p64
      %p66 = scmp.ne.s32.totalorder %s52, %s53
      %p67 = scmp.eq.s32.totalorder %s29, 3
      %p68 = por %p66, %p67
      %p70 = scmp.ne.s32.totalorder %s53, %s69
      %p71 = scmp.eq.s32.totalorder %s29, 0
      %p72 = por %p70, %p71
      %s74 = sadd.s32 %s73, 1
      %p77 = scmp.eq.s32.totalorder %s23, 3
      %p78 = scmp.ne.s32.totalorder %s73, %s75
      %p79 = scmp.eq.s32.totalorder %s23, 0
      %p80 = por %p78, %p79
      %p81 = scmp.ne.s32.totalorder %s73, %s75
      %p82 = scmp.eq.s32.totalorder %s28, 3
      %p83 = por %p81, %p82
      %p84 = scmp.ne.s32.totalorder %s75, %s76
      %p85 = scmp.eq.s32.totalorder %s28, 0
      %p86 = por %p84, %p85
      %p87 = scmp.ne.s32.totalorder %s75, %s76
      %p88 = scmp.eq.s32.totalorder %s29, 3
      %p89 = por %p87, %p88
      %p91 = scmp.ne.s32.totalorder %s76, %s90
      %p92 = scmp.eq.s32.totalorder %s29, 0
      %p93 = por %p91, %p92
      %s95 = sadd.s32 %s94, 1
      %p98 = scmp.eq.s32.totalorder %s23, 3
      %p99 = scmp.ne.s32.totalorder %s94, %s96
      %p100 = scmp.eq.s32.totalorder %s23, 0
      %p101 = por %p99, %p100
      %p102 = scmp.ne.s32.totalorder %s94, %s96
      %p103 = scmp.eq.s32.totalorder %s28, 3
      %p104 = por %p102, %p103
      %p105 = scmp.ne.s32.totalorder %s96, %s97
      %p106 = scmp.eq.s32.totalorder %s28, 0
      %p107 = por %p105, %p106
      %p108 = scmp.ne.s32.totalorder %s96, %s97
      %p109 = scmp.eq.s32.totalorder %s29, 3
      %p110 = por %p108, %p109
      %p112 = scmp.ne.s32.totalorder %s97, %s111
      %p113 = scmp.eq.s32.totalorder %s29, 0
      %p114 = por %p112, %p113
      %s115 = ssub.s32 %s30, %s42
      %p116 = scmp.eq.s32.totalorder %s115, 0
      %s118 = sadd.s32 %s117, 1
      %s119 = scalar_select %p116, %s117, %s118
      %p122 = pneg %p116
      %p123 = scmp.eq.s32.totalorder %s23, 3
      %p124 = por %p122, %p123
      %p125 = scmp.ne.s32.totalorder %s117, %s120
      %p126 = scmp.eq.s32.totalorder %s23, 0
      %p127 = por %p125, %p126
      %p128 = scmp.ne.s32.totalorder %s117, %s120
      %p129 = scmp.eq.s32.totalorder %s28, 3
      %p130 = por %p128, %p129
      %p131 = scmp.ne.s32.totalorder %s120, %s121
      %p132 = scmp.eq.s32.totalorder %s28, 0
      %p133 = por %p131, %p132
      %p134 = scmp.ne.s32.totalorder %s120, %s121
      %p135 = scmp.eq.s32.totalorder %s29, 3
      %p136 = por %p134, %p135
      %p138 = scmp.ne.s32.totalorder %s121, %s137
      %p139 = scmp.eq.s32.totalorder %s29, 0
      %p140 = por %p138, %p139
      %s141 = smul.u32 %s30, 2
      %s142 = sadd.s32 %s141, %s31
      %s143 = smul.u32 %s42, 2
      %s144 = sadd.s32 %s143, %s38
      %s145 = ssub.s32 %s142, %s144
      %p146 = scmp.eq.s32.totalorder %s145, 0
      %s148 = sadd.s32 %s147, 1
      %s149 = scalar_select %p146, %s147, %s148
      %p152 = pneg %p146
      %p153 = scmp.eq.s32.totalorder %s23, 3
      %p154 = por %p152, %p153
      %p155 = scmp.ne.s32.totalorder %s147, %s150
      %p156 = scmp.eq.s32.totalorder %s23, 0
      %p157 = por %p155, %p156
      %p158 = scmp.ne.s32.totalorder %s147, %s150
      %p159 = scmp.eq.s32.totalorder %s28, 3
      %p160 = por %p158, %p159
      %p161 = scmp.ne.s32.totalorder %s150, %s151
      %p162 = scmp.eq.s32.totalorder %s28, 0
      %p163 = por %p161, %p162
      %p164 = scmp.ne.s32.totalorder %s150, %s151
      %p165 = scmp.eq.s32.totalorder %s29, 3
      %p166 = por %p164, %p165
      %p168 = scmp.ne.s32.totalorder %s151, %s167
      %p169 = scmp.eq.s32.totalorder %s29, 0
      %p170 = por %p168, %p169
      %s171 = ssub.s32 %s30, %s42
      %p172 = scmp.eq.s32.totalorder %s171, 0
      %s174 = sadd.s32 %s173, 1
      %s175 = scalar_select %p172, %s173, %s174
      %p178 = pneg %p172
      %p179 = scmp.eq.s32.totalorder %s23, 3
      %p180 = por %p178, %p179
      %p181 = scmp.ne.s32.totalorder %s173, %s176
      %p182 = scmp.eq.s32.totalorder %s23, 0
      %p183 = por %p181, %p182
      %p184 = scmp.ne.s32.totalorder %s173, %s176
      %p185 = scmp.eq.s32.totalorder %s28, 3
      %p186 = por %p184, %p185
      %p187 = scmp.ne.s32.totalorder %s176, %s177
      %p188 = scmp.eq.s32.totalorder %s28, 0
      %p189 = por %p187, %p188
      %p190 = scmp.ne.s32.totalorder %s176, %s177
      %p191 = scmp.eq.s32.totalorder %s29, 3
      %p192 = por %p190, %p191
      %p194 = scmp.ne.s32.totalorder %s177, %s193
      %p195 = scmp.eq.s32.totalorder %s29, 0
      %p196 = por %p194, %p195
      %s197 = ssub.s32 %s30, %s42
      %p198 = scmp.eq.s32.totalorder %s197, 0
      %s200 = sadd.s32 %s199, 1
      %s201 = scalar_select %p198, %s199, %s200
      %p204 = pneg %p198
      %p205 = scmp.eq.s32.totalorder %s23, 3
      %p206 = por %p204, %p205
      %p207 = scmp.ne.s32.totalorder %s199, %s202
      %p208 = scmp.eq.s32.totalorder %s23, 0
      %p209 = por %p207, %p208
      %p210 = scmp.ne.s32.totalorder %s199, %s202
      %p211 = scmp.eq.s32.totalorder %s28, 3
      %p212 = por %p210, %p211
      %p213 = scmp.ne.s32.totalorder %s202, %s203
      %p214 = scmp.eq.s32.totalorder %s28, 0
      %p215 = por %p213, %p214
      %p216 = scmp.ne.s32.totalorder %s202, %s203
      %p217 = scmp.eq.s32.totalorder %s29, 3
      %p218 = por %p216, %p217
      %p220 = scmp.ne.s32.totalorder %s203, %s219
      %p221 = scmp.eq.s32.totalorder %s29, 0
      %p222 = por %p220, %p221
      %p223 = scmp.le.s32.totalorder 1, %s23
      %p224 = scmp.lt.s32.totalorder %s23, 5
      %p225 = pnand %p223, %p224
      %p226 = pneg %p225
      // Predicated region
      $region9: #{tpu_custom_call.1} parent=5 // pred_check
        _
      $region10: #{tpu_custom_call.1} parent=5 // pred_check_branch
        %228 = sbr.rel (%p225) target = $region12
      $region11: #{tpu_custom_call.1} parent=5 // pred_region
        %s229 = ssub.s32 %s23, 1
        // Predicated region
        $region13: #{tpu_custom_call.1} parent=11 // pred_check
          %p230 = pneg %p86
        $region14: #{tpu_custom_call.1} parent=11 // pred_check_branch
          %232 = sbr.rel (%p230) target = $region16
        $region15: #{tpu_custom_call.1} parent=11 // pred_region
          %s234 = ssub.s32 4096, 4096
          %235 = vsyncadd [#allocation9], %s234
          %s236 = sshll.u32 [#allocation8], 4
          %s237 = int_to_ptr.vmem [resolvable:$true] %s236
          %242 = dma.hbm_to_vmem [thread:$0]  %s1, 4096, %s237, [#allocation9], 256, 256, 16
        $region16: #{tpu_custom_call.1} parent=11 // pred_fallthru
          _
        // Predicated region
        $region17: #{tpu_custom_call.1} parent=11 // pred_check
          %p243 = pneg %p107
        $region18: #{tpu_custom_call.1} parent=11 // pred_check_branch
          %245 = sbr.rel (%p243) target = $region20
        $region19: #{tpu_custom_call.1} parent=11 // pred_region
          _
        $region20: #{tpu_custom_call.1} parent=11 // pred_fallthru
          _
      $region12: #{tpu_custom_call.1} parent=5 // pred_fallthru
        _
      %p246 = scmp.lt.s32.totalorder %s23, 4
      // Predicated region
      $region21: #{tpu_custom_call.1} parent=5 // pred_check
        %p247 = pneg %p246
      $region22: #{tpu_custom_call.1} parent=5 // pred_check_branch
        %249 = sbr.rel (%p247) target = $region24
      $region23: #{tpu_custom_call.1} parent=5 // pred_region
        // Predicated region
        $region25: #{tpu_custom_call.1} parent=23 // pred_check
          %p250 = pneg %p59
        $region26: #{tpu_custom_call.1} parent=23 // pred_check_branch
          %252 = sbr.rel (%p250) target = $region28
        $region27: #{tpu_custom_call.1} parent=23 // pred_region
          %s253 = sand.u32 %s49, 1
          %s254 = scalar_lea.sflag [#allocation6], %s253
          %s255 = sand.u32 %s49, 1
          %s256 = smul.addr %s255, 256
          %s257 = scalar_lea.vmem [#allocation5], %s256
          %s258 = smul.u32 %s30, 2
          %s259 = sadd.s32 %s258, %s31
          %s260 = smul.u32 16, %s259
          %s261 = ssub.s32 63, %s260
          %p262 = scmp.lt.s32.totalorder %s261, 16
          %s263 = scalar_select %p262, %s261, 16
          %s264 = smul.u32 128, %s263
          %s265 = smul.u32 %s264, 2
          %s267 = ssub.s32 4096, %s265
          %268 = vsyncadd %s254, %s267
          %p269 = scmp.ne.s32.totalorder 0, %s265
          %s270 = smul.addr %s260, 2
          %s271 = smul.addr %s270, 128
          %s272 = scalar_lea.hbm %s0, %s271
          %s273 = smul.u32 16, %s263
          %s274 = sshll.u32 %s257, 4
          %s275 = int_to_ptr.vmem [resolvable:$true] %s274
          %s276 = sshll.u32 %s273, 4
          %280 = dma.hbm_to_vmem [thread:$0]  (%p269), %s272, %s276, %s275, %s254, 256, 256, 16
        $region28: #{tpu_custom_call.1} parent=23 // pred_fallthru
          _
      $region24: #{tpu_custom_call.1} parent=5 // pred_fallthru
        _
      %p281 = scmp.le.s32.totalorder 1, %s23
      %p282 = scmp.lt.s32.totalorder %s23, 5
      %p283 = pnand %p281, %p282
      %p284 = pneg %p283
      // Predicated region
      $region29: #{tpu_custom_call.1} parent=5 // pred_check
        _
      $region30: #{tpu_custom_call.1} parent=5 // pred_check_branch
        %286 = sbr.rel (%p283) target = $region32
      $region31: #{tpu_custom_call.1} parent=5 // pred_region
        %s287 = ssub.s32 %s23, 1
        %s288 = sand.u32 %s52, 1
        %s289 = scalar_lea.sflag [#allocation6], %s288
        %s290 = sand.u32 %s52, 1
        %s291 = smul.addr %s290, 256
        %s292 = scalar_lea.vmem [#allocation5], %s291
        // Predicated region
        $region33: #{tpu_custom_call.1} parent=31 // pred_check
          %p293 = pneg %p65
        $region34: #{tpu_custom_call.1} parent=31 // pred_check_branch
          %295 = sbr.rel (%p293) target = $region36
        $region35: #{tpu_custom_call.1} parent=31 // pred_region
          %296 = dma.done %s289, 4096
        $region36: #{tpu_custom_call.1} parent=31 // pred_fallthru
          _
        // Predicated region
        $region37: #{tpu_custom_call.1} parent=31 // pred_check
          %p297 = pneg %p86
        $region38: #{tpu_custom_call.1} parent=31 // pred_check_branch
          %299 = sbr.rel (%p297) target = $region40
        $region39: #{tpu_custom_call.1} parent=31 // pred_region
          %300 = dma.done [#allocation9], 4096
        $region40: #{tpu_custom_call.1} parent=31 // pred_fallthru
          _
        %s301 = sand.u32 %s52, 1
        %s302 = scalar_lea.sflag [#allocation6], %s301
        %s303 = sand.u32 %s52, 1
        %s304 = smul.addr %s303, 256
        %s305 = scalar_lea.vmem [#allocation5], %s304
        %p306 = pneg %p65
        %p307 = pneg %p62
        %p308 = pneg %p86
        %p309 = pneg %p83
        %p310 = pneg %p107
        %p311 = pneg %p104
        %p312 = pneg %p133
        %p313 = pneg %p130
        %s314 = sand.u32 %s120, 1
        %s315 = scalar_lea.sflag [#allocation7], %s314
        %s316 = sand.u32 %s120, 1
        %s317 = smul.addr %s316, 2
        %s318 = scalar_lea.vmem [#allocation10], %s317
        %p319 = pneg %p163
        %p320 = pneg %p160
        %s321 = sand.u32 %s150, 1
        %s322 = scalar_lea.sflag [#allocation12], %s321
        %s323 = sand.u32 %s150, 1
        %s324 = scalar_lea.vmem [#allocation11], %s323
        %p325 = pneg %p189
        %p326 = pneg %p186
        %p327 = scmp.lt.s32.totalorder %s32, 1
        %s328 = scalar_select %p327, %s32, 1
        %s329 = scalar_lea.vmem %s5, %s328
        %p330 = pneg %p215
        %p331 = pneg %p212
        %p332 = scmp.lt.s32.totalorder %s32, 1
        %s333 = scalar_select %p332, %s32, 1
        %s334 = scalar_lea.vmem %s6, %s333
        %s335 = smul.u32 %s32, 2
        %s336 = sadd.s32 %s335, %s33
        %s337 = smul.u32 16, %s336
        %s338 = ssub.s32 63, %s337
        %p339 = scmp.lt.s32.totalorder %s338, 16
        %s340 = scalar_select %p339, %s338, 16
        %s341 = smul.u32 128, %s340
        %s342 = smul.u32 %s341, 2
        %s343 = smul.u32 %s32, 2
        %s344 = sadd.s32 %s343, %s33
        %p345 = scmp.lt.s32.totalorder %s32, 1
        %s346 = scalar_select %p345, %s32, 1
        %s347 = scalar_lea.vmem %s5, %s346
        %p348 = scmp.lt.s32.totalorder %s32, 1
        %s349 = scalar_select %p348, %s32, 1
        %s350 = scalar_lea.vmem %s6, %s349
        %s351 = smul.u32 %s32, 2
        %s352 = sadd.s32 %s351, %s33
        %p353 = scmp.eq.s32.totalorder %s33, 0
        // Predicated region
        $region41: #{tpu_custom_call.1} parent=31 // pred_check
          %p354 = pneg %p353
        $region42: #{tpu_custom_call.1} parent=31 // pred_check_branch
          %356 = sbr.rel (%p354) target = $region44
        $region43: #{tpu_custom_call.1} parent=31 // pred_region
          %vm357 = vcmask 0
          %358 = vst.msk [vmem:[#allocation2] sm:$0x1] %vm357, -inf
          %359 = vst.msk [vmem:[#allocation3] sm:$0x1] %vm357, 0.0
          %v360 = vlaneseq
          %vm361 = vcmp.ge.s32.totalorder %v360, 0
          %vm362 = vcmp.lt.s32.totalorder %v360, 256
          %vm363 = vmand %vm361, %vm362
          %364 = vst.msk [vmem:[#allocation4] sm:$0x3] %vm363, 0.0
        $region44: #{tpu_custom_call.1} parent=31 // pred_fallthru
          _
        %v365 = vld [vmem:[%s292] sm:$0xff]
        %v366 = vld [vmem:[%s292 + $0x8] sm:$0xff]
        %v367 = vld [vmem:[%s292 + $0x10] sm:$0xff]
        %v368 = vld [vmem:[%s292 + $0x18] sm:$0xff]
        %v369 = vld [vmem:[%s292 + $0x20] sm:$0xff]
        %v370 = vld [vmem:[%s292 + $0x28] sm:$0xff]
        %v371 = vld [vmem:[%s292 + $0x30] sm:$0xff]
        %v372 = vld [vmem:[%s292 + $0x38] sm:$0xff]
        %v373 = vld [vmem:[%s292 + $0x40] sm:$0xff]
        %v374 = vld [vmem:[%s292 + $0x48] sm:$0xff]
        %v375 = vld [vmem:[%s292 + $0x50] sm:$0xff]
        %v376 = vld [vmem:[%s292 + $0x58] sm:$0xff]
        %v377 = vld [vmem:[%s292 + $0x60] sm:$0xff]
        %v378 = vld [vmem:[%s292 + $0x68] sm:$0xff]
        %v379 = vld [vmem:[%s292 + $0x70] sm:$0xff]
        %v380 = vld [vmem:[%s292 + $0x78] sm:$0xff]
        %v381 = vld [vmem:[%s292 + $0x80] sm:$0xff]
        %v382 = vld [vmem:[%s292 + $0x88] sm:$0xff]
        %v383 = vld [vmem:[%s292 + $0x90] sm:$0xff]
        %v384 = vld [vmem:[%s292 + $0x98] sm:$0xff]
        %v385 = vld [vmem:[%s292 + $0xa0] sm:$0xff]
        %v386 = vld [vmem:[%s292 + $0xa8] sm:$0xff]
        %v387 = vld [vmem:[%s292 + $0xb0] sm:$0xff]
        %v388 = vld [vmem:[%s292 + $0xb8] sm:$0xff]
        %v389 = vld [vmem:[%s292 + $0xc0] sm:$0xff]
        %v390 = vld [vmem:[%s292 + $0xc8] sm:$0xff]
        %v391 = vld [vmem:[%s292 + $0xd0] sm:$0xff]
        %v392 = vld [vmem:[%s292 + $0xd8] sm:$0xff]
        %v393 = vld [vmem:[%s292 + $0xe0] sm:$0xff]
        %v394 = vld [vmem:[%s292 + $0xe8] sm:$0xff]
        %v395 = vld [vmem:[%s292 + $0xf0] sm:$0xff]
        %v396 = vld [vmem:[%s292 + $0xf8] sm:$0xff]
        %v397 = vld [vmem:[#allocation8] sm:$0xff]
        %v398 = vld [vmem:[#allocation8 + $0x8] sm:$0xff]
        %v399 = vld [vmem:[#allocation8 + $0x10] sm:$0xff]
        %v400 = vld [vmem:[#allocation8 + $0x18] sm:$0xff]
        %v401 = vld [vmem:[#allocation8 + $0x20] sm:$0xff]
        %v402 = vld [vmem:[#allocation8 + $0x28] sm:$0xff]
        %v403 = vld [vmem:[#allocation8 + $0x30] sm:$0xff]
        %v404 = vld [vmem:[#allocation8 + $0x38] sm:$0xff]
        %v405 = vld [vmem:[#allocation8 + $0x40] sm:$0xff]
        %v406 = vld [vmem:[#allocation8 + $0x48] sm:$0xff]
        %v407 = vld [vmem:[#allocation8 + $0x50] sm:$0xff]
        %v408 = vld [vmem:[#allocation8 + $0x58] sm:$0xff]
        %v409 = vld [vmem:[#allocation8 + $0x60] sm:$0xff]
        %v410 = vld [vmem:[#allocation8 + $0x68] sm:$0xff]
        %v411 = vld [vmem:[#allocation8 + $0x70] sm:$0xff]
        %v412 = vld [vmem:[#allocation8 + $0x78] sm:$0xff]
        %v413 = vld [vmem:[#allocation8 + $0x80] sm:$0xff]
        %v414 = vld [vmem:[#allocation8 + $0x88] sm:$0xff]
        %v415 = vld [vmem:[#allocation8 + $0x90] sm:$0xff]
        %v416 = vld [vmem:[#allocation8 + $0x98] sm:$0xff]
        %v417 = vld [vmem:[#allocation8 + $0xa0] sm:$0xff]
        %v418 = vld [vmem:[#allocation8 + $0xa8] sm:$0xff]
        %v419 = vld [vmem:[#allocation8 + $0xb0] sm:$0xff]
        %v420 = vld [vmem:[#allocation8 + $0xb8] sm:$0xff]
        %v421 = vld [vmem:[#allocation8 + $0xc0] sm:$0xff]
        %v422 = vld [vmem:[#allocation8 + $0xc8] sm:$0xff]
        %v423 = vld [vmem:[#allocation8 + $0xd0] sm:$0xff]
        %v424 = vld [vmem:[#allocation8 + $0xd8] sm:$0xff]
        %v425 = vld [vmem:[#allocation8 + $0xe0] sm:$0xff]
        %v426 = vld [vmem:[#allocation8 + $0xe8] sm:$0xff]
        %v427 = vld [vmem:[#allocation8 + $0xf0] sm:$0xff]
        %v428 = vld [vmem:[#allocation8 + $0xf8] sm:$0xff]
        %429 = vmatprep.subr.mxu0 %v396
        %430 = vmatpush1.xpose.msra.mxu0 %v395
        %431 = vmatprep.subr.mxu0 %v394
        %432 = vmatpush1.xpose.msra.mxu0 %v393
        %433 = vmatprep.subr.mxu0 %v392
        %434 = vmatpush1.xpose.msra.mxu0 %v391
        %435 = vmatprep.subr.mxu0 %v390
        %436 = vmatpush1.xpose.msra.mxu0 %v389
        %437 = vmatprep.subr.mxu0 %v388
        %438 = vmatpush1.xpose.msra.mxu0 %v387
        %439 = vmatprep.subr.mxu0 %v386
        %440 = vmatpush1.xpose.msra.mxu0 %v385
        %441 = vmatprep.subr.mxu0 %v384
        %442 = vmatpush1.xpose.msra.mxu0 %v383
        %443 = vmatprep.subr.mxu0 %v382
        %444 = vmatpush1.xpose.msra.mxu0 %v381
        %445 = vmatprep.subr.mxu0 %v380
        %446 = vmatpush1.xpose.msra.mxu0 %v379
        %447 = vmatprep.subr.mxu0 %v378
        %448 = vmatpush1.xpose.msra.mxu0 %v377
        %449 = vmatprep.subr.mxu0 %v376
        %450 = vmatpush1.xpose.msra.mxu0 %v375
        %451 = vmatprep.subr.mxu0 %v374
        %452 = vmatpush1.xpose.msra.mxu0 %v373
        %453 = vmatprep.subr.mxu0 %v372
        %454 = vmatpush1.xpose.msra.mxu0 %v371
        %455 = vmatprep.subr.mxu0 %v370
        %456 = vmatpush1.xpose.msra.mxu0 %v369
        %457 = vmatprep.subr.mxu0 %v368
        %458 = vmatpush1.xpose.msra.mxu0 %v367
        %459 = vmatprep.subr.mxu0 %v366
        %460 = vmatpush1.xpose.msra.mxu0 %v365
        %461 = vmatprep.subr.mxu0 0.0
        %462 = vmatpush2.xpose.msra.mxu0 0.0
        %463 = vmatprep.subr.mxu0 0.0
        %464 = vmatpush2.xpose.msra.mxu0 0.0
        %465 = vmatprep.subr.mxu0 0.0
        %466 = vmatpush2.xpose.msra.mxu0 0.0
        %467 = vmatprep.subr.mxu0 0.0
        %468 = vmatpush2.xpose.msra.mxu0 0.0
        %469 = vmatprep.subr.mxu0 0.0
        %470 = vmatpush2.xpose.msra.mxu0 0.0
        %471 = vmatprep.subr.mxu0 0.0
        %472 = vmatpush2.xpose.msra.mxu0 0.0
        %473 = vmatprep.subr.mxu0 0.0
        %474 = vmatpush2.xpose.msra.mxu0 0.0
        %475 = vmatprep.subr.mxu0 0.0
        %476 = vmatpush2.xpose.msra.mxu0 0.0
        %477 = vmatprep.subr.mxu0 0.0
        %478 = vmatpush2.xpose.msra.mxu0 0.0
        %479 = vmatprep.subr.mxu0 0.0
        %480 = vmatpush2.xpose.msra.mxu0 0.0
        %481 = vmatprep.subr.mxu0 0.0
        %482 = vmatpush2.xpose.msra.mxu0 0.0
        %483 = vmatprep.subr.mxu0 0.0
        %484 = vmatpush2.xpose.msra.mxu0 0.0
        %485 = vmatprep.subr.mxu0 0.0
        %486 = vmatpush2.xpose.msra.mxu0 0.0
        %487 = vmatprep.subr.mxu0 0.0
        %488 = vmatpush2.xpose.msra.mxu0 0.0
        %489 = vmatprep.subr.mxu0 0.0
        %490 = vmatpush2.xpose.msra.mxu0 0.0
        %491 = vmatprep.subr.mxu0 0.0
        %492 = vmatpush2.xpose.msra.mxu0 0.0
        %493 = vmatprep.mubr.f32.mxu0 %v398
        %494 = vmatmul.mubr.f32.gmra.mxu0 %v397
        %v495 = vpop.f32.mrf.mxu0
        %v496 = vadd.f32 0.0, %v495
        %v497 = vpop.f32.mrf.mxu0
        %498 = vmatprep.mubr.f32.mxu0 %v400
        %499 = vmatmul.mubr.f32.gmra.mxu0 %v399
        %v500 = vpop.f32.mrf.mxu0
        %v501 = vadd.f32 0.0, %v500
        %v502 = vpop.f32.mrf.mxu0
        %503 = vmatprep.mubr.f32.mxu0 %v402
        %504 = vmatmul.mubr.f32.gmra.mxu0 %v401
        %v505 = vpop.f32.mrf.mxu0
        %v506 = vadd.f32 0.0, %v505
        %v507 = vpop.f32.mrf.mxu0
        %508 = vmatprep.mubr.f32.mxu0 %v404
        %509 = vmatmul.mubr.f32.gmra.mxu0 %v403
        %v510 = vpop.f32.mrf.mxu0
        %v511 = vadd.f32 0.0, %v510
        %v512 = vpop.f32.mrf.mxu0
        %513 = vmatprep.mubr.f32.mxu0 %v406
        %514 = vmatmul.mubr.f32.gmra.mxu0 %v405
        %v515 = vpop.f32.mrf.mxu0
        %v516 = vadd.f32 0.0, %v515
        %v517 = vpop.f32.mrf.mxu0
        %518 = vmatprep.mubr.f32.mxu0 %v408
        %519 = vmatmul.mubr.f32.gmra.mxu0 %v407
        %v520 = vpop.f32.mrf.mxu0
        %v521 = vadd.f32 0.0, %v520
        %v522 = vpop.f32.mrf.mxu0
        %523 = vmatprep.mubr.f32.mxu0 %v410
        %524 = vmatmul.mubr.f32.gmra.mxu0 %v409
        %v525 = vpop.f32.mrf.mxu0
        %v526 = vadd.f32 0.0, %v525
        %v527 = vpop.f32.mrf.mxu0
        %528 = vmatprep.mubr.f32.mxu0 %v412
        %529 = vmatmul.mubr.f32.gmra.mxu0 %v411
        %v530 = vpop.f32.mrf.mxu0
        %v531 = vadd.f32 0.0, %v530
        %v532 = vpop.f32.mrf.mxu0
        %533 = vmatprep.mubr.f32.mxu0 %v414
        %534 = vmatmul.mubr.f32.gmra.mxu0 %v413
        %v535 = vpop.f32.mrf.mxu0
        %v536 = vadd.f32 0.0, %v535
        %v537 = vpop.f32.mrf.mxu0
        %538 = vmatprep.mubr.f32.mxu0 %v416
        %539 = vmatmul.mubr.f32.gmra.mxu0 %v415
        %v540 = vpop.f32.mrf.mxu0
        %v541 = vadd.f32 0.0, %v540
        %v542 = vpop.f32.mrf.mxu0
        %543 = vmatprep.mubr.f32.mxu0 %v418
        %544 = vmatmul.mubr.f32.gmra.mxu0 %v417
        %v545 = vpop.f32.mrf.mxu0
        %v546 = vadd.f32 0.0, %v545
        %v547 = vpop.f32.mrf.mxu0
        %548 = vmatprep.mubr.f32.mxu0 %v420
        %549 = vmatmul.mubr.f32.gmra.mxu0 %v419
        %v550 = vpop.f32.mrf.mxu0
        %v551 = vadd.f32 0.0, %v550
        %v552 = vpop.f32.mrf.mxu0
        %553 = vmatprep.mubr.f32.mxu0 %v422
        %554 = vmatmul.mubr.f32.gmra.mxu0 %v421
        %v555 = vpop.f32.mrf.mxu0
        %v556 = vadd.f32 0.0, %v555
        %v557 = vpop.f32.mrf.mxu0
        %558 = vmatprep.mubr.f32.mxu0 %v424
        %559 = vmatmul.mubr.f32.gmra.mxu0 %v423
        %v560 = vpop.f32.mrf.mxu0
        %v561 = vadd.f32 0.0, %v560
        %v562 = vpop.f32.mrf.mxu0
        %563 = vmatprep.mubr.f32.mxu0 %v426
        %564 = vmatmul.mubr.f32.gmra.mxu0 %v425
        %v565 = vpop.f32.mrf.mxu0
        %v566 = vadd.f32 0.0, %v565
        %v567 = vpop.f32.mrf.mxu0
        %568 = vmatprep.mubr.f32.mxu0 %v428
        %569 = vmatmul.mubr.f32.gmra.mxu0 %v427
        %v570 = vpop.f32.mrf.mxu0
        %v571 = vadd.f32 0.0, %v570
        %v572 = vpop.f32.mrf.mxu0
        %573 = vdwg.mxu0
        %v574 = vmax.f32 %v496, 0.0
        %v575 = vmax.f32 %v501, 0.0
        %v576 = vmax.f32 %v506, 0.0
        %v577 = vmax.f32 %v511, 0.0
        %v578 = vmax.f32 %v516, 0.0
        %v579 = vmax.f32 %v521, 0.0
        %v580 = vmax.f32 %v526, 0.0
        %v581 = vmax.f32 %v531, 0.0
        %v582 = vmax.f32 %v536, 0.0
        %v583 = vmax.f32 %v541, 0.0
        %v584 = vmax.f32 %v546, 0.0
        %v585 = vmax.f32 %v551, 0.0
        %v586 = vmax.f32 %v556, 0.0
        %v587 = vmax.f32 %v561, 0.0
        %v588 = vmax.f32 %v566, 0.0
        %v589 = vmax.f32 %v571, 0.0
        %v590 = vld [vmem:[%s2] sm:$0x1]
        %591 = vmatprep.subr.mxu0 0.0
        %592 = vmatpush1.msra.mxu0 %v589
        %593 = vmatprep.subr.mxu0 0.0
        %594 = vmatpush1.msra.mxu0 %v588
        %595 = vmatprep.subr.mxu0 0.0
        %596 = vmatpush1.msra.mxu0 %v587
        %597 = vmatprep.subr.mxu0 0.0
        %598 = vmatpush1.msra.mxu0 %v586
        %599 = vmatprep.subr.mxu0 0.0
        %600 = vmatpush1.msra.mxu0 %v585
        %601 = vmatprep.subr.mxu0 0.0
        %602 = vmatpush1.msra.mxu0 %v584
        %603 = vmatprep.subr.mxu0 0.0
        %604 = vmatpush1.msra.mxu0 %v583
        %605 = vmatprep.subr.mxu0 0.0
        %606 = vmatpush1.msra.mxu0 %v582
        %607 = vmatprep.subr.mxu0 0.0
        %608 = vmatpush1.msra.mxu0 %v581
        %609 = vmatprep.subr.mxu0 0.0
        %610 = vmatpush1.msra.mxu0 %v580
        %611 = vmatprep.subr.mxu0 0.0
        %612 = vmatpush1.msra.mxu0 %v579
        %613 = vmatprep.subr.mxu0 0.0
        %614 = vmatpush1.msra.mxu0 %v578
        %615 = vmatprep.subr.mxu0 0.0
        %616 = vmatpush1.msra.mxu0 %v577
        %617 = vmatprep.subr.mxu0 0.0
        %618 = vmatpush1.msra.mxu0 %v576
        %619 = vmatprep.subr.mxu0 0.0
        %620 = vmatpush1.msra.mxu0 %v575
        %621 = vmatprep.subr.mxu0 0.0
        %622 = vmatpush1.msra.mxu0 %v574
        %623 = vmatprep.subr.mxu0 0.0
        %624 = vmatpush2.msra.mxu0 0.0
        %625 = vmatprep.subr.mxu0 0.0
        %626 = vmatpush2.msra.mxu0 0.0
        %627 = vmatprep.subr.mxu0 0.0
        %628 = vmatpush2.msra.mxu0 0.0
        %629 = vmatprep.subr.mxu0 0.0
        %630 = vmatpush2.msra.mxu0 0.0
        %631 = vmatprep.subr.mxu0 0.0
        %632 = vmatpush2.msra.mxu0 0.0
        %633 = vmatprep.subr.mxu0 0.0
        %634 = vmatpush2.msra.mxu0 0.0
        %635 = vmatprep.subr.mxu0 0.0
        %636 = vmatpush2.msra.mxu0 0.0
        %637 = vmatprep.subr.mxu0 0.0
        %638 = vmatpush2.msra.mxu0 0.0
        %639 = vmatprep.subr.mxu0 0.0
        %640 = vmatpush2.msra.mxu0 0.0
        %641 = vmatprep.subr.mxu0 0.0
        %642 = vmatpush2.msra.mxu0 0.0
        %643 = vmatprep.subr.mxu0 0.0
        %644 = vmatpush2.msra.mxu0 0.0
        %645 = vmatprep.subr.mxu0 0.0
        %646 = vmatpush2.msra.mxu0 0.0
        %647 = vmatprep.subr.mxu0 0.0
        %648 = vmatpush2.msra.mxu0 0.0
        %649 = vmatprep.subr.mxu0 0.0
        %650 = vmatpush2.msra.mxu0 0.0
        %651 = vmatprep.subr.mxu0 0.0
        %652 = vmatpush2.msra.mxu0 0.0
        %653 = vmatprep.subr.mxu0 0.0
        %654 = vmatpush2.msra.mxu0 0.0
        %655 = vmatprep.mubr.f32.mxu0 0.0
        %656 = vmatmul.mubr.f32.gmra.mxu0 %v590
        %v657 = vpop.f32.mrf.mxu0
        %v658 = vadd.f32 0.0, %v657
        %v659 = vpop.f32.mrf.mxu0
        %660 = vdwg.mxu0
        %v661 = vlaneseq
        %v662 = vand.u32 %v661, 127
        %s663 = smul.u32 %s352, 128
        %v664 = vstv %s663
        %v665 = vadd.s32 %v664, %v662
        %vm666 = vcmp.lt.s32.totalorder %v665, 500
        %v667 = vsel %vm666, %v658, -inf
        %v668 = vld [vmem:[#allocation2] sm:$0x1]
        %vm669 = vcmask 1040384
        %v670 = vsel %vm669, %v667, -inf
        %671 = vmax.xlane.f32.xlu0 %v670
        %v672 = vpop.xlane.xlu0 %671
        %v673 = vmax.f32 %v668, %v672
        %v674 = vsub.f32 %v668, %v673
        %v675 = vmul.f32 %v674, 1.442695
        %v676 = vpow.pop %v675
        %678 = vset.pattern.permute.xlu0 0
        %679 = vperm.xlu0 %678, %v673
        %v680 = vpop.permute.xlu0 %679
        %v682 = vlaneseq
        %v683 = vshrl.u32 %v682, 7
        %v684 = vsub.s32 0, %v683
        %v685 = vrot.slane %v680, %v684
        %v686 = vsub.f32 %v667, %v685
        %v687 = vmul.f32 %v686, 1.442695
        %v688 = vpow.pop %v687
        %v689 = vld [vmem:[#allocation3] sm:$0x1]
        %v690 = vmul.f32 %v676, %v689
        %v691 = vsel %vm669, %v688, 0.0
        %692 = vadd.xlane.f32.xlu0 %v691
        %v693 = vpop.xlane.xlu0 %692
        %v694 = vadd.f32 %v690, %v693
        %vm695 = vcmask 0
        %696 = vst.msk [vmem:[#allocation3] sm:$0x1] %vm695, %v694
        %697 = vst.msk [vmem:[#allocation2] sm:$0x1] %vm695, %v673
        %p698 = scmp.ne.s32.totalorder %s352, 3
        // Predicated region
        $region45: #{tpu_custom_call.1} parent=31 // pred_check
          %p699 = pneg %p698
        $region46: #{tpu_custom_call.1} parent=31 // pred_check_branch
          %701 = sbr.rel (%p699) target = $region48
        $region47: #{tpu_custom_call.1} parent=31 // pred_region
          %702 = vmatprep.subr.mxu0 %v396
          %703 = vmatpush1.msra.mxu0 %v395
          %704 = vmatprep.subr.mxu0 %v394
          %705 = vmatpush1.msra.mxu0 %v393
          %706 = vmatprep.subr.mxu0 %v392
          %707 = vmatpush1.msra.mxu0 %v391
          %708 = vmatprep.subr.mxu0 %v390
          %709 = vmatpush1.msra.mxu0 %v389
          %710 = vmatprep.subr.mxu0 %v388
          %711 = vmatpush1.msra.mxu0 %v387
          %712 = vmatprep.subr.mxu0 %v386
          %713 = vmatpush1.msra.mxu0 %v385
          %714 = vmatprep.subr.mxu0 %v384
          %715 = vmatpush1.msra.mxu0 %v383
          %716 = vmatprep.subr.mxu0 %v382
          %717 = vmatpush1.msra.mxu0 %v381
          %718 = vmatprep.subr.mxu0 %v380
          %719 = vmatpush1.msra.mxu0 %v379
          %720 = vmatprep.subr.mxu0 %v378
          %721 = vmatpush1.msra.mxu0 %v377
          %722 = vmatprep.subr.mxu0 %v376
          %723 = vmatpush1.msra.mxu0 %v375
          %724 = vmatprep.subr.mxu0 %v374
          %725 = vmatpush1.msra.mxu0 %v373
          %726 = vmatprep.subr.mxu0 %v372
          %727 = vmatpush1.msra.mxu0 %v371
          %728 = vmatprep.subr.mxu0 %v370
          %729 = vmatpush1.msra.mxu0 %v369
          %730 = vmatprep.subr.mxu0 %v368
          %731 = vmatpush1.msra.mxu0 %v367
          %732 = vmatprep.subr.mxu0 %v366
          %733 = vmatpush1.msra.mxu0 %v365
          %734 = vmatprep.subr.mxu0 0.0
          %735 = vmatpush2.msra.mxu0 0.0
          %736 = vmatprep.subr.mxu0 0.0
          %737 = vmatpush2.msra.mxu0 0.0
          %738 = vmatprep.subr.mxu0 0.0
          %739 = vmatpush2.msra.mxu0 0.0
          %740 = vmatprep.subr.mxu0 0.0
          %741 = vmatpush2.msra.mxu0 0.0
          %742 = vmatprep.subr.mxu0 0.0
          %743 = vmatpush2.msra.mxu0 0.0
          %744 = vmatprep.subr.mxu0 0.0
          %745 = vmatpush2.msra.mxu0 0.0
          %746 = vmatprep.subr.mxu0 0.0
          %747 = vmatpush2.msra.mxu0 0.0
          %748 = vmatprep.subr.mxu0 0.0
          %749 = vmatpush2.msra.mxu0 0.0
          %750 = vmatprep.subr.mxu0 0.0
          %751 = vmatpush2.msra.mxu0 0.0
          %752 = vmatprep.subr.mxu0 0.0
          %753 = vmatpush2.msra.mxu0 0.0
          %754 = vmatprep.subr.mxu0 0.0
          %755 = vmatpush2.msra.mxu0 0.0
          %756 = vmatprep.subr.mxu0 0.0
          %757 = vmatpush2.msra.mxu0 0.0
          %758 = vmatprep.subr.mxu0 0.0
          %759 = vmatpush2.msra.mxu0 0.0
          %760 = vmatprep.subr.mxu0 0.0
          %761 = vmatpush2.msra.mxu0 0.0
          %762 = vmatprep.subr.mxu0 0.0
          %763 = vmatpush2.msra.mxu0 0.0
          %764 = vmatprep.subr.mxu0 0.0
          %765 = vmatpush2.msra.mxu0 0.0
          %766 = vmatprep.mubr.f32.mxu0 0.0
          %767 = vmatmul.mubr.f32.gmra.mxu0 %v688
          %v768 = vpop.f32.mrf.mxu0
          %v769 = vadd.f32 0.0, %v768
          %v770 = vpop.f32.mrf.mxu0
          %v771 = vadd.f32 0.0, %v770
          %772 = vdwg.mxu0
          %v773 = vld [vmem:[#allocation4] sm:$0x3]
          %775 = vset.pattern.permute.xlu0 0
          %776 = vperm.xlu0 %775, %v676
          %v777 = vpop.permute.xlu0 %776
          %v779 = vlaneseq
          %v780 = vshrl.u32 %v779, 7
          %v781 = vsub.s32 0, %v780
          %v782 = vrot.slane %v777, %v781
          %v783 = vmul.f32 %v782, %v773
          %v786 = vcombine.low %v769, %v771
          %v788 = vunpack.c.l.s4 1966171168
          %v789 = vunpack.c.0.s8 %v788
          %v790 = vlaneseq
          %v791 = vshrl.u32 %v790, 7
          %v792 = vsub.s32 %v789, %v791
          %v793 = vrot.slane %v786, %v792
          %v795 = vunpack.c.l.s4 1966171168
          %v796 = vunpack.c.0.s8 %v795
          %v797 = vlaneseq
          %v798 = vshrl.u32 %v797, 7
          %v799 = vsub.s32 %v796, %v798
          %v800 = vrot.slane %v793, %v799
          %v802 = vadd.f32 %v783, %v800
          %v803 = vlaneseq
          %vm804 = vcmp.ge.s32.totalorder %v803, 0
          %vm805 = vcmp.lt.s32.totalorder %v803, 256
          %vm806 = vmand %vm804, %vm805
          %807 = vst.msk [vmem:[#allocation4] sm:$0x3] %vm806, %v802
        $region48: #{tpu_custom_call.1} parent=31 // pred_fallthru
          _
        %p808 = scmp.eq.s32.totalorder %s352, 3
        // Predicated region
        $region49: #{tpu_custom_call.1} parent=31 // pred_check
          %p809 = pneg %p808
        $region50: #{tpu_custom_call.1} parent=31 // pred_check_branch
          %811 = sbr.rel (%p809) target = $region52
        $region51: #{tpu_custom_call.1} parent=31 // pred_region
          %v812 = vlaneseq
          %v813 = vshrl.u32 %v812, 7
          %v814 = vadd.s32 %v813, 8
          %v815 = vadd.s32 %v813, 16
          %v816 = vadd.s32 %v813, 24
          %v817 = vadd.s32 %v813, 32
          %v818 = vadd.s32 %v813, 40
          %v819 = vadd.s32 %v813, 48
          %v820 = vadd.s32 %v813, 56
          %v821 = vadd.s32 %v813, 64
          %v822 = vadd.s32 %v813, 72
          %v823 = vadd.s32 %v813, 80
          %v824 = vadd.s32 %v813, 88
          %v825 = vadd.s32 %v813, 96
          %v826 = vadd.s32 %v813, 104
          %v827 = vadd.s32 %v813, 112
          %v828 = vadd.s32 %v813, 120
          %v829 = vadd.s32 %v664, %v813
          %v830 = vadd.s32 %v664, %v814
          %v831 = vadd.s32 %v664, %v815
          %v832 = vadd.s32 %v664, %v816
          %v833 = vadd.s32 %v664, %v817
          %v834 = vadd.s32 %v664, %v818
          %v835 = vadd.s32 %v664, %v819
          %v836 = vadd.s32 %v664, %v820
          %v837 = vadd.s32 %v664, %v821
          %v838 = vadd.s32 %v664, %v822
          %v839 = vadd.s32 %v664, %v823
          %v840 = vadd.s32 %v664, %v824
          %v841 = vadd.s32 %v664, %v825
          %v842 = vadd.s32 %v664, %v826
          %v843 = vadd.s32 %v664, %v827
          %v844 = vadd.s32 %v664, %v828
          %vm845 = vcmp.lt.s32.totalorder %v829, 500
          %vm846 = vcmp.lt.s32.totalorder %v830, 500
          %vm847 = vcmp.lt.s32.totalorder %v831, 500
          %vm848 = vcmp.lt.s32.totalorder %v832, 500
          %vm849 = vcmp.lt.s32.totalorder %v833, 500
          %vm850 = vcmp.lt.s32.totalorder %v834, 500
          %vm851 = vcmp.lt.s32.totalorder %v835, 500
          %vm852 = vcmp.lt.s32.totalorder %v836, 500
          %vm853 = vcmp.lt.s32.totalorder %v837, 500
          %vm854 = vcmp.lt.s32.totalorder %v838, 500
          %vm855 = vcmp.lt.s32.totalorder %v839, 500
          %vm856 = vcmp.lt.s32.totalorder %v840, 500
          %vm857 = vcmp.lt.s32.totalorder %v841, 500
          %vm858 = vcmp.lt.s32.totalorder %v842, 500
          %vm859 = vcmp.lt.s32.totalorder %v843, 500
          %vm860 = vcmp.lt.s32.totalorder %v844, 500
          %v861 = vsel %vm845, 1, 0
          %v862 = vsel %vm846, 1, 0
          %v863 = vsel %vm847, 1, 0
          %v864 = vsel %vm848, 1, 0
          %v865 = vsel %vm849, 1, 0
          %v866 = vsel %vm850, 1, 0
          %v867 = vsel %vm851, 1, 0
          %v868 = vsel %vm852, 1, 0
          %v869 = vsel %vm853, 1, 0
          %v870 = vsel %vm854, 1, 0
          %v871 = vsel %vm855, 1, 0
          %v872 = vsel %vm856, 1, 0
          %v873 = vsel %vm857, 1, 0
          %v874 = vsel %vm858, 1, 0
          %v875 = vsel %vm859, 1, 0
          %v876 = vsel %vm860, 1, 0
          %vm877 = vcmp.eq.s32.totalorder %v861, 1
          %vm878 = vcmp.eq.s32.totalorder %v862, 1
          %vm879 = vcmp.eq.s32.totalorder %v863, 1
          %vm880 = vcmp.eq.s32.totalorder %v864, 1
          %vm881 = vcmp.eq.s32.totalorder %v865, 1
          %vm882 = vcmp.eq.s32.totalorder %v866, 1
          %vm883 = vcmp.eq.s32.totalorder %v867, 1
          %vm884 = vcmp.eq.s32.totalorder %v868, 1
          %vm885 = vcmp.eq.s32.totalorder %v869, 1
          %vm886 = vcmp.eq.s32.totalorder %v870, 1
          %vm887 = vcmp.eq.s32.totalorder %v871, 1
          %vm888 = vcmp.eq.s32.totalorder %v872, 1
          %vm889 = vcmp.eq.s32.totalorder %v873, 1
          %vm890 = vcmp.eq.s32.totalorder %v874, 1
          %vm891 = vcmp.eq.s32.totalorder %v875, 1
          %vm892 = vcmp.eq.s32.totalorder %v876, 1
          %v893 = vsel %vm877, %v365, 0.0
          %v894 = vsel %vm877, %v366, 0.0
          %v895 = vsel %vm878, %v367, 0.0
          %v896 = vsel %vm878, %v368, 0.0
          %v897 = vsel %vm879, %v369, 0.0
          %v898 = vsel %vm879, %v370, 0.0
          %v899 = vsel %vm880, %v371, 0.0
          %v900 = vsel %vm880, %v372, 0.0
          %v901 = vsel %vm881, %v373, 0.0
          %v902 = vsel %vm881, %v374, 0.0
          %v903 = vsel %vm882, %v375, 0.0
          %v904 = vsel %vm882, %v376, 0.0
          %v905 = vsel %vm883, %v377, 0.0
          %v906 = vsel %vm883, %v378, 0.0
          %v907 = vsel %vm884, %v379, 0.0
          %v908 = vsel %vm884, %v380, 0.0
          %v909 = vsel %vm885, %v381, 0.0
          %v910 = vsel %vm885, %v382, 0.0
          %v911 = vsel %vm886, %v383, 0.0
          %v912 = vsel %vm886, %v384, 0.0
          %v913 = vsel %vm887, %v385, 0.0
          %v914 = vsel %vm887, %v386, 0.0
          %v915 = vsel %vm888, %v387, 0.0
          %v916 = vsel %vm888, %v388, 0.0
          %v917 = vsel %vm889, %v389, 0.0
          %v918 = vsel %vm889, %v390, 0.0
          %v919 = vsel %vm890, %v391, 0.0
          %v920 = vsel %vm890, %v392, 0.0
          %v921 = vsel %vm891, %v393, 0.0
          %v922 = vsel %vm891, %v394, 0.0
          %v923 = vsel %vm892, %v395, 0.0
          %v924 = vsel %vm892, %v396, 0.0
          %925 = vmatprep.subr.mxu0 %v924
          %926 = vmatpush1.msra.mxu0 %v923
          %927 = vmatprep.subr.mxu0 %v922
          %928 = vmatpush1.msra.mxu0 %v921
          %929 = vmatprep.subr.mxu0 %v920
          %930 = vmatpush1.msra.mxu0 %v919
          %931 = vmatprep.subr.mxu0 %v918
          %932 = vmatpush1.msra.mxu0 %v917
          %933 = vmatprep.subr.mxu0 %v916
          %934 = vmatpush1.msra.mxu0 %v915
          %935 = vmatprep.subr.mxu0 %v914
          %936 = vmatpush1.msra.mxu0 %v913
          %937 = vmatprep.subr.mxu0 %v912
          %938 = vmatpush1.msra.mxu0 %v911
          %939 = vmatprep.subr.mxu0 %v910
          %940 = vmatpush1.msra.mxu0 %v909
          %941 = vmatprep.subr.mxu0 %v908
          %942 = vmatpush1.msra.mxu0 %v907
          %943 = vmatprep.subr.mxu0 %v906
          %944 = vmatpush1.msra.mxu0 %v905
          %945 = vmatprep.subr.mxu0 %v904
          %946 = vmatpush1.msra.mxu0 %v903
          %947 = vmatprep.subr.mxu0 %v902
          %948 = vmatpush1.msra.mxu0 %v901
          %949 = vmatprep.subr.mxu0 %v900
          %950 = vmatpush1.msra.mxu0 %v899
          %951 = vmatprep.subr.mxu0 %v898
          %952 = vmatpush1.msra.mxu0 %v897
          %953 = vmatprep.subr.mxu0 %v896
          %954 = vmatpush1.msra.mxu0 %v895
          %955 = vmatprep.subr.mxu0 %v894
          %956 = vmatpush1.msra.mxu0 %v893
          %957 = vmatprep.subr.mxu0 0.0
          %958 = vmatpush2.msra.mxu0 0.0
          %959 = vmatprep.subr.mxu0 0.0
          %960 = vmatpush2.msra.mxu0 0.0
          %961 = vmatprep.subr.mxu0 0.0
          %962 = vmatpush2.msra.mxu0 0.0
          %963 = vmatprep.subr.mxu0 0.0
          %964 = vmatpush2.msra.mxu0 0.0
          %965 = vmatprep.subr.mxu0 0.0
          %966 = vmatpush2.msra.mxu0 0.0
          %967 = vmatprep.subr.mxu0 0.0
          %968 = vmatpush2.msra.mxu0 0.0
          %969 = vmatprep.subr.mxu0 0.0
          %970 = vmatpush2.msra.mxu0 0.0
          %971 = vmatprep.subr.mxu0 0.0
          %972 = vmatpush2.msra.mxu0 0.0
          %973 = vmatprep.subr.mxu0 0.0
          %974 = vmatpush2.msra.mxu0 0.0
          %975 = vmatprep.subr.mxu0 0.0
          %976 = vmatpush2.msra.mxu0 0.0
          %977 = vmatprep.subr.mxu0 0.0
          %978 = vmatpush2.msra.mxu0 0.0
          %979 = vmatprep.subr.mxu0 0.0
          %980 = vmatpush2.msra.mxu0 0.0
          %981 = vmatprep.subr.mxu0 0.0
          %982 = vmatpush2.msra.mxu0 0.0
          %983 = vmatprep.subr.mxu0 0.0
          %984 = vmatpush2.msra.mxu0 0.0
          %985 = vmatprep.subr.mxu0 0.0
          %986 = vmatpush2.msra.mxu0 0.0
          %987 = vmatprep.subr.mxu0 0.0
          %988 = vmatpush2.msra.mxu0 0.0
          %989 = vmatprep.mubr.f32.mxu0 0.0
          %990 = vmatmul.mubr.f32.gmra.mxu0 %v688
          %v991 = vpop.f32.mrf.mxu0
          %v992 = vadd.f32 0.0, %v991
          %v993 = vpop.f32.mrf.mxu0
          %v994 = vadd.f32 0.0, %v993
          %995 = vdwg.mxu0
          %v996 = vld [vmem:[#allocation4] sm:$0x3]
          %998 = vset.pattern.permute.xlu0 0
          %999 = vperm.xlu0 %998, %v676
          %v1000 = vpop.permute.xlu0 %999
          %v1002 = vlaneseq
          %v1003 = vshrl.u32 %v1002, 7
          %v1004 = vsub.s32 0, %v1003
          %v1005 = vrot.slane %v1000, %v1004
          %v1006 = vmul.f32 %v1005, %v996
          %v1009 = vcombine.low %v992, %v994
          %v1011 = vunpack.c.l.s4 1966171168
          %v1012 = vunpack.c.0.s8 %v1011
          %v1013 = vlaneseq
          %v1014 = vshrl.u32 %v1013, 7
          %v1015 = vsub.s32 %v1012, %v1014
          %v1016 = vrot.slane %v1009, %v1015
          %v1018 = vunpack.c.l.s4 1966171168
          %v1019 = vunpack.c.0.s8 %v1018
          %v1020 = vlaneseq
          %v1021 = vshrl.u32 %v1020, 7
          %v1022 = vsub.s32 %v1019, %v1021
          %v1023 = vrot.slane %v1016, %v1022
          %v1025 = vadd.f32 %v1006, %v1023
          %v1026 = vlaneseq
          %vm1027 = vcmp.ge.s32.totalorder %v1026, 0
          %vm1028 = vcmp.lt.s32.totalorder %v1026, 256
          %vm1029 = vmand %vm1027, %vm1028
          %1030 = vst.msk [vmem:[#allocation4] sm:$0x3] %vm1029, %v1025
        $region52: #{tpu_custom_call.1} parent=31 // pred_fallthru
          _
        %1031 = vst [vmem:[%s324] sm:$0x1] %v667
        %p1032 = scmp.eq.s32.totalorder %s33, 1
        // Predicated region
        $region53: #{tpu_custom_call.1} parent=31 // pred_check
          %p1033 = pneg %p1032
        $region54: #{tpu_custom_call.1} parent=31 // pred_check_branch
          %1035 = sbr.rel (%p1033) target = $region56
        $region55: #{tpu_custom_call.1} parent=31 // pred_region
          %v1036 = vld [vmem:[#allocation4] sm:$0x3]
          %v1037 = vlaneseq
          %vm1038 = vcmp.ge.s32.totalorder %v1037, 0
          %vm1039 = vcmp.lt.s32.totalorder %v1037, 256
          %vm1040 = vmand %vm1038, %vm1039
          %1041 = vst.msk [vmem:[%s318] sm:$0x3] %vm1040, %v1036
          %v1042 = vld [vmem:[#allocation2] sm:$0x1]
          %1043 = vst.msk [vmem:[%s347] sm:$0x1] %vm695, %v1042
          %v1044 = vld [vmem:[#allocation3] sm:$0x1]
          %1045 = vst.msk [vmem:[%s350] sm:$0x1] %vm695, %v1044
        $region56: #{tpu_custom_call.1} parent=31 // pred_fallthru
          _
        %s1046 = sand.u32 %s120, 1
        %s1047 = scalar_lea.sflag [#allocation7], %s1046
        %s1048 = sand.u32 %s120, 1
        %s1049 = smul.addr %s1048, 2
        %s1050 = scalar_lea.vmem [#allocation10], %s1049
        %s1051 = sand.u32 %s150, 1
        %s1052 = scalar_lea.sflag [#allocation12], %s1051
        %s1053 = sand.u32 %s150, 1
        %s1054 = scalar_lea.vmem [#allocation11], %s1053
        %p1055 = scmp.lt.s32.totalorder %s32, 1
        %s1056 = scalar_select %p1055, %s32, 1
        %s1057 = scalar_lea.vmem %s5, %s1056
        %p1058 = scmp.lt.s32.totalorder %s32, 1
        %s1059 = scalar_select %p1058, %s32, 1
        %s1060 = scalar_lea.vmem %s6, %s1059
        // Predicated region
        $region57: #{tpu_custom_call.1} parent=31 // pred_check
          %p1061 = pneg %p130
        $region58: #{tpu_custom_call.1} parent=31 // pred_check_branch
          %1063 = sbr.rel (%p1061) target = $region60
        $region59: #{tpu_custom_call.1} parent=31 // pred_region
          %s1065 = ssub.s32 32, 32
          %1066 = vsyncadd %s1047, %s1065
          %s1067 = smul.addr %s32, 2
          %s1068 = smul.addr %s1067, 16
          %s1069 = scalar_lea.hbm %s3, %s1068
          %s1071 = sshll.u32 %s1050, 4
          %s1072 = int_to_ptr.vmem [resolvable:$true] %s1071
          %1074 = dma.vmem_to_hbm [thread:$0]  %s1072, 32, %s1069, %s1047
        $region60: #{tpu_custom_call.1} parent=31 // pred_fallthru
          _
        // Predicated region
        $region61: #{tpu_custom_call.1} parent=31 // pred_check
          %p1075 = pneg %p160
        $region62: #{tpu_custom_call.1} parent=31 // pred_check_branch
          %1077 = sbr.rel (%p1075) target = $region64
        $region63: #{tpu_custom_call.1} parent=31 // pred_region
          %s1078 = smul.u32 %s32, 2
          %s1079 = sadd.s32 %s1078, %s33
          %s1081 = ssub.s32 16, 16
          %1082 = vsyncadd %s1052, %s1081
          %s1083 = smul.addr %s1079, 16
          %s1084 = scalar_lea.hbm %s4, %s1083
          %s1086 = sshll.u32 %s1054, 4
          %s1087 = int_to_ptr.vmem [resolvable:$true] %s1086
          %1089 = dma.vmem_to_hbm [thread:$0]  %s1087, 16, %s1084, %s1052
        $region64: #{tpu_custom_call.1} parent=31 // pred_fallthru
          _
        // Predicated region
        $region65: #{tpu_custom_call.1} parent=31 // pred_check
          %p1090 = pneg %p186
        $region66: #{tpu_custom_call.1} parent=31 // pred_check_branch
          %1092 = sbr.rel (%p1090) target = $region68
        $region67: #{tpu_custom_call.1} parent=31 // pred_region
          _
        $region68: #{tpu_custom_call.1} parent=31 // pred_fallthru
          _
        // Predicated region
        $region69: #{tpu_custom_call.1} parent=31 // pred_check
          %p1093 = pneg %p212
        $region70: #{tpu_custom_call.1} parent=31 // pred_check_branch
          %1095 = sbr.rel (%p1093) target = $region72
        $region71: #{tpu_custom_call.1} parent=31 // pred_region
          _
        $region72: #{tpu_custom_call.1} parent=31 // pred_fallthru
          _
      $region32: #{tpu_custom_call.1} parent=5 // pred_fallthru
        _
      %p1096 = scmp.le.s32.totalorder 2, %s23
      // Predicated region
      $region73: #{tpu_custom_call.1} parent=5 // pred_check
        %p1097 = pneg %p1096
      $region74: #{tpu_custom_call.1} parent=5 // pred_check_branch
        %1099 = sbr.rel (%p1097) target = $region76
      $region75: #{tpu_custom_call.1} parent=5 // pred_region
        %s1100 = ssub.s32 %s23, 2
        // Predicated region
        $region77: #{tpu_custom_call.1} parent=75 // pred_check
          %p1101 = pneg %p136
        $region78: #{tpu_custom_call.1} parent=75 // pred_check_branch
          %1103 = sbr.rel (%p1101) target = $region80
        $region79: #{tpu_custom_call.1} parent=75 // pred_region
          %s1104 = sand.u32 %s121, 1
          %s1105 = scalar_lea.sflag [#allocation7], %s1104
          %s1106 = sand.u32 %s121, 1
          %s1107 = smul.addr %s1106, 2
          %s1108 = scalar_lea.vmem [#allocation10], %s1107
          %1109 = dma.done %s1105, 32
        $region80: #{tpu_custom_call.1} parent=75 // pred_fallthru
          _
        // Predicated region
        $region81: #{tpu_custom_call.1} parent=75 // pred_check
          %p1110 = pneg %p166
        $region82: #{tpu_custom_call.1} parent=75 // pred_check_branch
          %1112 = sbr.rel (%p1110) target = $region84
        $region83: #{tpu_custom_call.1} parent=75 // pred_region
          %s1113 = sand.u32 %s151, 1
          %s1114 = scalar_lea.sflag [#allocation12], %s1113
          %s1115 = sand.u32 %s151, 1
          %s1116 = scalar_lea.vmem [#allocation11], %s1115
          %1117 = dma.done %s1114, 16
        $region84: #{tpu_custom_call.1} parent=75 // pred_fallthru
          _
        // Predicated region
        $region85: #{tpu_custom_call.1} parent=75 // pred_check
          %p1118 = pneg %p192
        $region86: #{tpu_custom_call.1} parent=75 // pred_check_branch
          %1120 = sbr.rel (%p1118) target = $region88
        $region87: #{tpu_custom_call.1} parent=75 // pred_region
          %p1121 = scmp.lt.s32.totalorder %s34, 1
          %s1122 = scalar_select %p1121, %s34, 1
          %s1123 = scalar_lea.vmem %s5, %s1122
        $region88: #{tpu_custom_call.1} parent=75 // pred_fallthru
          _
        // Predicated region
        $region89: #{tpu_custom_call.1} parent=75 // pred_check
          %p1124 = pneg %p218
        $region90: #{tpu_custom_call.1} parent=75 // pred_check_branch
          %1126 = sbr.rel (%p1124) target = $region92
        $region91: #{tpu_custom_call.1} parent=75 // pred_region
          %p1127 = scmp.lt.s32.totalorder %s34, 1
          %s1128 = scalar_select %p1127, %s34, 1
          %s1129 = scalar_lea.vmem %s6, %s1128
        $region92: #{tpu_custom_call.1} parent=75 // pred_fallthru
          _
      $region76: #{tpu_custom_call.1} parent=5 // pred_fallthru
        _
    $region6: #{tpu_custom_call.1} parent=1 // loop_footer
      %s27 = sadd.s32 1, %s23
    $region7: #{tpu_custom_call.1} parent=1 // loop_footer_branch
      %22 = sbr.rel target = $region3
    $region8: #{tpu_custom_call.1} parent=1 // loop_exit
      _
    %1130 = vsyncpa [#allocation6], 1
    %s1131 = scalar_lea.sflag [#allocation6], 1
    %1132 = vsyncpa %s1131, 1
    %1133 = vsyncpa [#allocation9], 1
    %1134 = vsyncpa [#allocation7], 1
    %s1135 = scalar_lea.sflag [#allocation7], 1
    %1136 = vsyncpa %s1135, 1
    %1137 = vsyncpa [#allocation12], 1
    %s1138 = scalar_lea.sflag [#allocation12], 1
    %1139 = vsyncpa %s1138, 1

</llo_original>
